<compile_context>
chip_gen: v7x
topology: tpu7x:2x2x1
jax: 0.10.0
libtpu: 0.0.40
codegen_flags: <defaults>
</compile_context>

<pallas_src>
import functools
import math

import jax
import jax.numpy as jnp
from jax.experimental import pallas as pl
from jax.experimental.pallas import tpu as pltpu


def _yoso_output_kernel(x_ref, w_ref, p_ref, res_ref, o_ref, *, eps):
    # x_ref: (tm, I); w_ref: (I, H) bf16; p_ref: (3, H) f32 = [bias; gamma; beta]
    # res_ref: (tm, H); o_ref: (tm, H)
    params = p_ref[...].astype(jnp.float32)          # hoisted, cast once per tile
    bias, gamma, beta = params[0:1, :], params[1:2, :], params[2:3, :]

    # bf16 MXU matmul with f32 accumulation.
    y = jnp.dot(x_ref[...].astype(jnp.bfloat16), w_ref[...],
                preferred_element_type=jnp.float32)
    # TODO(synk): dropout omitted (inference semantics, effective p = 0).
    y = y + bias + res_ref[...].astype(jnp.float32)

    # LayerNorm over the last dim (biased variance, matches torch.nn.LayerNorm).
    mean = jnp.mean(y, axis=-1, keepdims=True)
    centered = y - mean
    var = jnp.mean(centered * centered, axis=-1, keepdims=True)
    inv = jax.lax.rsqrt(var + eps)
    o_ref[...] = (centered * inv * gamma + beta).astype(o_ref.dtype)


def _round_up(x, m):
    return (x + m - 1) // m * m


def yoso_output(hidden_states, input_tensor, weight, bias, ln_gamma, ln_beta,
                *, eps=1e-12, tm=512):
    """hidden_states: (B, S, I); input_tensor: (B, S, H); weight: (I, H)
    (torch nn.Linear weight, transposed); bias / ln_gamma / ln_beta: (H,).
    Returns (B, S, H) in input_tensor.dtype."""
    B, S, I = hidden_states.shape
    H = input_tensor.shape[-1]
    M = B * S

    x2d = hidden_states.reshape(M, I)
    r2d = input_tensor.reshape(M, H)
    w_bf16 = weight.astype(jnp.bfloat16)                      # resident weight in bf16
    params = jnp.stack([bias, ln_gamma, ln_beta]).astype(jnp.float32)   # (3, H)

    # Row tile: a multiple of 8 sublanes, or the full M when M <= tm.
    tm = max(8, _round_up(min(tm, M), 8))
    if tm >= M:
        tm = M
    grid = pl.cdiv(M, tm)

    # VMEM budget: single-buffered bf16 weight + packed params + double-buffered
    # streamed tiles, with generous headroom for kernel-internal f32 temporaries.
    footprint = (I * H * 2
                 + 3 * H * 4
                 + 2 * tm * I * x2d.dtype.itemsize
                 + 2 * tm * H * r2d.dtype.itemsize
                 + 2 * tm * H * r2d.dtype.itemsize)
    vmem_limit = int(min(112 * 2**20, max(32 * 2**20, 2 * footprint + 8 * 2**20)))

    def build(single_buffer_consts):
        const_kw = ({"pipeline_mode": pl.Buffered(1)} if single_buffer_consts else {})
        return pl.pallas_call(
            functools.partial(_yoso_output_kernel, eps=eps),
            out_shape=jax.ShapeDtypeStruct((M, H), input_tensor.dtype),
            grid_spec=pltpu.PrefetchScalarGridSpec(
                num_scalar_prefetch=0,
                grid=(grid,),
                in_specs=[
                    pl.BlockSpec((tm, I), lambda i: (i, 0)),             # activations (streamed)
                    pl.BlockSpec((I, H), lambda i: (0, 0), **const_kw),  # weight (resident)
                    pl.BlockSpec((3, H), lambda i: (0, 0), **const_kw),  # bias/gamma/beta
                    pl.BlockSpec((tm, H), lambda i: (i, 0)),             # residual (streamed)
                ],
                out_specs=pl.BlockSpec((tm, H), lambda i: (i, 0)),
            ),
            compiler_params=pltpu.CompilerParams(
                dimension_semantics=("parallel",),
                vmem_limit_bytes=vmem_limit,
            ),
        )

    try:
        out = build(True)(x2d, w_bf16, params, r2d)
    except Exception:
        # Fallback if this JAX build rejects pl.Buffered on a top-level BlockSpec;
        # the constant index_map already avoids re-fetching the weight per tile.
        out = build(False)(x2d, w_bf16, params, r2d)

    return out.reshape(B, S, H)


if __name__ == "__main__":
    # Small config consistent with YosoOutput (hidden_size=128, intermediate=512);
    # seq chosen so the last row tile is partial, exercising the un-padded path.
    batch, seq, hidden, intermediate = 2, 72, 128, 512
    eps = 1e-12

    key = jax.random.PRNGKey(0)
    k_x, k_r, k_w, k_b, k_g, k_bb = jax.random.split(key, 6)

    hidden_states = jax.random.normal(k_x, (batch, seq, intermediate), jnp.float32)
    input_tensor = jax.random.normal(k_r, (batch, seq, hidden), jnp.float32)

    # nn.Linear-like init; weight stored pre-transposed as (I, H).
    bound = 1.0 / math.sqrt(intermediate)
    weight = jax.random.uniform(k_w, (intermediate, hidden), jnp.float32, -bound, bound)
    bias = jax.random.uniform(k_b, (hidden,), jnp.float32, -bound, bound)
    ln_gamma = 1.0 + 0.1 * jax.random.normal(k_g, (hidden,), jnp.float32)
    ln_beta = 0.1 * jax.random.normal(k_bb, (hidden,), jnp.float32)

    out = yoso_output(hidden_states, input_tensor, weight, bias,
                      ln_gamma, ln_beta, eps=eps, tm=64)
    jax.block_until_ready(out)

    # Reference (plain JAX): same bf16 cast of the matmul operands, f32 everything else.
    xb = hidden_states.astype(jnp.bfloat16).astype(jnp.float32)
    wb = weight.astype(jnp.bfloat16).astype(jnp.float32)
    y = jnp.einsum("bsi,ih->bsh", xb, wb,
                   precision=jax.lax.Precision.HIGHEST,
                   preferred_element_type=jnp.float32) + bias + input_tensor
    mean = y.mean(-1, keepdims=True)
    var = ((y - mean) ** 2).mean(-1, keepdims=True)
    ref = (y - mean) / jnp.sqrt(var + eps) * ln_gamma + ln_beta

    assert out.shape == (batch, seq, hidden)
    max_err = float(jnp.max(jnp.abs(out - ref)))
    assert jnp.allclose(out, ref, atol=3e-3, rtol=3e-3), max_err

    print("KERNEL_OK")
</pallas_src>

<mosaic_0001>
module attributes {stable_mosaic.version = 11 : i64} {
  func.func @_yoso_output_kernel(%arg0: i32, %arg1: memref<64x512xf32, #tpu.memory_space<vmem>>, %arg2: memref<512x128xbf16, #tpu.memory_space<vmem>>, %arg3: memref<3x128xf32, #tpu.memory_space<vmem>>, %arg4: memref<64x128xf32, #tpu.memory_space<vmem>>, %arg5: memref<64x128xf32, #tpu.memory_space<vmem>>) attributes {dimension_semantics = [#tpu.dimension_semantics<parallel>], iteration_bounds = array<i64: 3>, scalar_prefetch = 0 : i64, scratch_operands = 0 : i64, tpu.core_type = #tpu.core_type<tc>, window_params = [{transform_indices = @transform_0, window_bounds = array<i64: 64, 512>}, {pipeline_mode = #tpu.pipeline_mode<synchronous>, transform_indices = @transform_1, window_bounds = array<i64: 512, 128>}, {pipeline_mode = #tpu.pipeline_mode<synchronous>, transform_indices = @transform_2, window_bounds = array<i64: 3, 128>}, {transform_indices = @transform_3, window_bounds = array<i64: 64, 128>}, {transform_indices = @transform_4, window_bounds = array<i64: 64, 128>}]} {
    %c0 = arith.constant 0 : index
    %c0_0 = arith.constant 0 : index
    %0 = vector.load %arg3[%c0, %c0_0] : memref<3x128xf32, #tpu.memory_space<vmem>>, vector<3x128xf32>
    %1 = vector.extract_strided_slice %0 {offsets = [0, 0], sizes = [1, 128], strides = [1, 1]} : vector<3x128xf32> to vector<1x128xf32>
    %2 = vector.extract_strided_slice %0 {offsets = [1, 0], sizes = [1, 128], strides = [1, 1]} : vector<3x128xf32> to vector<1x128xf32>
    %3 = vector.extract_strided_slice %0 {offsets = [2, 0], sizes = [1, 128], strides = [1, 1]} : vector<3x128xf32> to vector<1x128xf32>
    %c0_1 = arith.constant 0 : index
    %c0_2 = arith.constant 0 : index
    %4 = vector.load %arg1[%c0_1, %c0_2] : memref<64x512xf32, #tpu.memory_space<vmem>>, vector<64x512xf32>
    %5 = arith.truncf %4 : vector<64x512xf32> to vector<64x512xbf16>
    %c0_3 = arith.constant 0 : index
    %c0_4 = arith.constant 0 : index
    %6 = vector.load %arg2[%c0_3, %c0_4] : memref<512x128xbf16, #tpu.memory_space<vmem>>, vector<512x128xbf16>
    %cst = arith.constant dense<0.000000e+00> : vector<64x128xf32>
    %7 = tpu.matmul %5, %6, %cst {dimension_numbers = #tpu.dot_dimension_numbers<[1], [0], [0], [1], [0, 0, 1, 1], [], []>} : vector<64x512xbf16>, vector<512x128xbf16>, vector<64x128xf32> -> vector<64x128xf32>
    %8 = vector.broadcast %1 : vector<1x128xf32> to vector<64x128xf32>
    %9 = arith.addf %7, %8 : vector<64x128xf32>
    %c0_5 = arith.constant 0 : index
    %c0_6 = arith.constant 0 : index
    %10 = vector.load %arg4[%c0_5, %c0_6] : memref<64x128xf32, #tpu.memory_space<vmem>>, vector<64x128xf32>
    %11 = arith.addf %9, %10 : vector<64x128xf32>
    %cst_7 = arith.constant dense<0.000000e+00> : vector<64xf32>
    %12 = vector.multi_reduction <add>, %11, %cst_7 [1] : vector<64x128xf32> to vector<64xf32>
    %13 = vector.shape_cast %12 : vector<64xf32> to vector<64x1xf32>
    %cst_8 = arith.constant 1.280000e+02 : f32
    %14 = vector.broadcast %cst_8 : f32 to vector<64x1xf32>
    %15 = arith.divf %13, %14 : vector<64x1xf32>
    %16 = vector.broadcast %15 : vector<64x1xf32> to vector<64x128xf32>
    %17 = arith.subf %11, %16 : vector<64x128xf32>
    %18 = arith.mulf %17, %17 : vector<64x128xf32>
    %cst_9 = arith.constant dense<0.000000e+00> : vector<64xf32>
    %19 = vector.multi_reduction <add>, %18, %cst_9 [1] : vector<64x128xf32> to vector<64xf32>
    %20 = vector.shape_cast %19 : vector<64xf32> to vector<64x1xf32>
    %cst_10 = arith.constant 1.280000e+02 : f32
    %21 = vector.broadcast %cst_10 : f32 to vector<64x1xf32>
    %22 = arith.divf %20, %21 : vector<64x1xf32>
    %cst_11 = arith.constant 9.99999996E-13 : f32
    %23 = vector.broadcast %cst_11 : f32 to vector<64x1xf32>
    %24 = arith.addf %22, %23 : vector<64x1xf32>
    %25 = math.rsqrt %24 : vector<64x1xf32>
    %26 = vector.broadcast %25 : vector<64x1xf32> to vector<64x128xf32>
    %27 = arith.mulf %17, %26 : vector<64x128xf32>
    %28 = vector.broadcast %2 : vector<1x128xf32> to vector<64x128xf32>
    %29 = arith.mulf %27, %28 : vector<64x128xf32>
    %30 = vector.broadcast %3 : vector<1x128xf32> to vector<64x128xf32>
    %31 = arith.addf %29, %30 : vector<64x128xf32>
    %c0_12 = arith.constant 0 : index
    %c0_13 = arith.constant 0 : index
    %32 = vector.load %arg5[%c0_12, %c0_13] : memref<64x128xf32, #tpu.memory_space<vmem>>, vector<64x128xf32>
    tpu.vector_store %arg5[%c0_12, %c0_13], %31 {strides = array<i32>} : memref<64x128xf32, #tpu.memory_space<vmem>>, vector<64x128xf32>,
    return
  }
  func.func @transform_0(%arg0: i32) -> (i32, i32) {
    %c0_i32 = arith.constant 0 : i32
    %c0_i32_0 = arith.constant 0 : i32
    return %arg0, %c0_i32 : i32, i32
  }
  func.func @transform_1(%arg0: i32) -> (i32, i32) {
    %c0_i32 = arith.constant 0 : i32
    %c0_i32_0 = arith.constant 0 : i32
    %c0_i32_1 = arith.constant 0 : i32
    return %c0_i32, %c0_i32_0 : i32, i32
  }
  func.func @transform_2(%arg0: i32) -> (i32, i32) {
    %c0_i32 = arith.constant 0 : i32
    %c0_i32_0 = arith.constant 0 : i32
    %c0_i32_1 = arith.constant 0 : i32
    return %c0_i32, %c0_i32_0 : i32, i32
  }
  func.func @transform_3(%arg0: i32) -> (i32, i32) {
    %c0_i32 = arith.constant 0 : i32
    %c0_i32_0 = arith.constant 0 : i32
    return %arg0, %c0_i32 : i32, i32
  }
  func.func @transform_4(%arg0: i32) -> (i32, i32) {
    %c0_i32 = arith.constant 0 : i32
    %c0_i32_0 = arith.constant 0 : i32
    return %arg0, %c0_i32 : i32, i32
  }
}

module attributes {stable_mosaic.version = 11 : i64} {
  func.func @_yoso_output_kernel(%arg0: i32, %arg1: memref<64x512xf32, #tpu.memory_space<vmem>>, %arg2: memref<512x128xbf16, #tpu.memory_space<vmem>>, %arg3: memref<3x128xf32, #tpu.memory_space<vmem>>, %arg4: memref<64x128xf32, #tpu.memory_space<vmem>>, %arg5: memref<64x128xf32, #tpu.memory_space<vmem>>) attributes {dimension_semantics = [#tpu.dimension_semantics<parallel>], iteration_bounds = array<i64: 3>, scalar_prefetch = 0 : i64, scratch_operands = 0 : i64, tpu.core_type = #tpu.core_type<tc>, window_params = [{transform_indices = @transform_0, window_bounds = array<i64: 64, 512>}, {pipeline_mode = #tpu.pipeline_mode<synchronous>, transform_indices = @transform_1, window_bounds = array<i64: 512, 128>}, {pipeline_mode = #tpu.pipeline_mode<synchronous>, transform_indices = @transform_2, window_bounds = array<i64: 3, 128>}, {transform_indices = @transform_3, window_bounds = array<i64: 64, 128>}, {transform_indices = @transform_4, window_bounds = array<i64: 64, 128>}]} {
    %c0 = arith.constant 0 : index
    %c0_0 = arith.constant 0 : index
    %0 = vector.load %arg3[%c0, %c0_0] : memref<3x128xf32, #tpu.memory_space<vmem>>, vector<3x128xf32>
    %1 = vector.extract_strided_slice %0 {offsets = [0, 0], sizes = [1, 128], strides = [1, 1]} : vector<3x128xf32> to vector<1x128xf32>
    %2 = vector.extract_strided_slice %0 {offsets = [1, 0], sizes = [1, 128], strides = [1, 1]} : vector<3x128xf32> to vector<1x128xf32>
    %3 = vector.extract_strided_slice %0 {offsets = [2, 0], sizes = [1, 128], strides = [1, 1]} : vector<3x128xf32> to vector<1x128xf32>
    %c0_1 = arith.constant 0 : index
    %c0_2 = arith.constant 0 : index
    %4 = vector.load %arg1[%c0_1, %c0_2] : memref<64x512xf32, #tpu.memory_space<vmem>>, vector<64x512xf32>
    %5 = arith.truncf %4 : vector<64x512xf32> to vector<64x512xbf16>
    %c0_3 = arith.constant 0 : index
    %c0_4 = arith.constant 0 : index
    %6 = vector.load %arg2[%c0_3, %c0_4] : memref<512x128xbf16, #tpu.memory_space<vmem>>, vector<512x128xbf16>
    %cst = arith.constant dense<0.000000e+00> : vector<64x128xf32>
    %7 = tpu.matmul %5, %6, %cst {dimension_numbers = #tpu.dot_dimension_numbers<[1], [0], [0], [1], [0, 0, 1, 1], [], []>} : vector<64x512xbf16>, vector<512x128xbf16>, vector<64x128xf32> -> vector<64x128xf32>
    %8 = vector.broadcast %1 : vector<1x128xf32> to vector<64x128xf32>
    %9 = arith.addf %7, %8 : vector<64x128xf32>
    %c0_5 = arith.constant 0 : index
    %c0_6 = arith.constant 0 : index
    %10 = vector.load %arg4[%c0_5, %c0_6] : memref<64x128xf32, #tpu.memory_space<vmem>>, vector<64x128xf32>
    %11 = arith.addf %9, %10 : vector<64x128xf32>
    %cst_7 = arith.constant dense<0.000000e+00> : vector<64xf32>
    %12 = vector.multi_reduction <add>, %11, %cst_7 [1] : vector<64x128xf32> to vector<64xf32>
    %13 = vector.shape_cast %12 : vector<64xf32> to vector<64x1xf32>
    %cst_8 = arith.constant 1.280000e+02 : f32
    %14 = vector.broadcast %cst_8 : f32 to vector<64x1xf32>
    %15 = arith.divf %13, %14 : vector<64x1xf32>
    %16 = vector.broadcast %15 : vector<64x1xf32> to vector<64x128xf32>
    %17 = arith.subf %11, %16 : vector<64x128xf32>
    %18 = arith.mulf %17, %17 : vector<64x128xf32>
    %cst_9 = arith.constant dense<0.000000e+00> : vector<64xf32>
    %19 = vector.multi_reduction <add>, %18, %cst_9 [1] : vector<64x128xf32> to vector<64xf32>
    %20 = vector.shape_cast %19 : vector<64xf32> to vector<64x1xf32>
    %cst_10 = arith.constant 1.280000e+02 : f32
    %21 = vector.broadcast %cst_10 : f32 to vector<64x1xf32>
    %22 = arith.divf %20, %21 : vector<64x1xf32>
    %cst_11 = arith.constant 9.99999996E-13 : f32
    %23 = vector.broadcast %cst_11 : f32 to vector<64x1xf32>
    %24 = arith.addf %22, %23 : vector<64x1xf32>
    %25 = math.rsqrt %24 : vector<64x1xf32>
    %26 = vector.broadcast %25 : vector<64x1xf32> to vector<64x128xf32>
    %27 = arith.mulf %17, %26 : vector<64x128xf32>
    %28 = vector.broadcast %2 : vector<1x128xf32> to vector<64x128xf32>
    %29 = arith.mulf %27, %28 : vector<64x128xf32>
    %30 = vector.broadcast %3 : vector<1x128xf32> to vector<64x128xf32>
    %31 = arith.addf %29, %30 : vector<64x128xf32>
    %c0_12 = arith.constant 0 : index
    %c0_13 = arith.constant 0 : index
    %32 = vector.load %arg5[%c0_12, %c0_13] : memref<64x128xf32, #tpu.memory_space<vmem>>, vector<64x128xf32>
    tpu.vector_store %arg5[%c0_12, %c0_13], %31 {strides = array<i32>} : memref<64x128xf32, #tpu.memory_space<vmem>>, vector<64x128xf32>,
    return
  }
  func.func @transform_0(%arg0: i32) -> (i32, i32) {
    %c0_i32 = arith.constant 0 : i32
    %c0_i32_0 = arith.constant 0 : i32
    return %arg0, %c0_i32 : i32, i32
  }
  func.func @transform_1(%arg0: i32) -> (i32, i32) {
    %c0_i32 = arith.constant 0 : i32
    %c0_i32_0 = arith.constant 0 : i32
    %c0_i32_1 = arith.constant 0 : i32
    return %c0_i32, %c0_i32_0 : i32, i32
  }
  func.func @transform_2(%arg0: i32) -> (i32, i32) {
    %c0_i32 = arith.constant 0 : i32
    %c0_i32_0 = arith.constant 0 : i32
    %c0_i32_1 = arith.constant 0 : i32
    return %c0_i32, %c0_i32_0 : i32, i32
  }
  func.func @transform_3(%arg0: i32) -> (i32, i32) {
    %c0_i32 = arith.constant 0 : i32
    %c0_i32_0 = arith.constant 0 : i32
    return %arg0, %c0_i32 : i32, i32
  }
  func.func @transform_4(%arg0: i32) -> (i32, i32) {
    %c0_i32 = arith.constant 0 : i32
    %c0_i32_0 = arith.constant 0 : i32
    return %arg0, %c0_i32 : i32, i32
  }
}

</mosaic_0001>

<llo_original>
// kernel: tpu_custom_call.1
$region0: #{tpu_custom_call.1}
  #allocation0 [shape = 'u32[]', space=smem, size = 0x4, offset = 0x4, fixed_abs, tag = 'smem constant byte address 0x4 - core index']
  #allocation1 [shape = 'u32[144,128]{1,0:T(1,128)}', space=vmem, size = 0x12000, scoped, tag = 'internal scratch']
  %s0 = inlined_call_operand.hbm [shape: f32[144,512], index: 0, kind: input, shape index: {}]
  %s1 = inlined_call_operand.hbm [shape: bf16[512,128], index: 1, kind: input, shape index: {}]
  %s2 = inlined_call_operand.vmem [shape: f32[3,128], index: 2, kind: input, shape index: {}]
  %s3 = inlined_call_operand.hbm [shape: f32[144,128], index: 3, kind: input, shape index: {}]
  %s4 = inlined_call_operand.hbm [shape: f32[144,128], index: 4, kind: output, shape index: {}]
  %s5 = sld [smem:[#allocation0]]
  $region61: #{tpu_custom_call.1} parent=0
    _
  %s7 = ssub.s32 1, %s5
  %s8 = scalar_select 0, %s7, %s5
  $region1: #{tpu_custom_call.1} parent=0
    #allocation2 [shape = 'u8[262144]{0}', space=vmem, size = 0x40000, scoped, tag = 'input window, operand 0']
    #allocation3 [shape = 's32[2]{0}', space=sflag, size = 0x8, scoped, tag = 'scoped memory for tpu_custom_call.1']
    #allocation4 [shape = 's32[2]{0}', space=sflag, size = 0x8, scoped, tag = 'scoped memory for tpu_custom_call.1']
    #allocation5 [shape = 'u8[131072]{0}', space=vmem, size = 0x20000, scoped, tag = 'input window, operand 1, single buffered']
    #allocation6 [shape = 's32[1]{0}', space=sflag, size = 0x4, scoped, tag = 'scoped memory for tpu_custom_call.1']
    #allocation7 [shape = 'u8[65536]{0}', space=vmem, size = 0x10000, scoped, tag = 'input window, operand 3']
    #allocation8 [shape = 'u8[65536]{0}', space=vmem, size = 0x10000, scoped, tag = 'output window, operand 0']
    %9 = vsyncpa [#allocation3], 0
    %s10 = scalar_lea.sflag [#allocation3], 1
    %11 = vsyncpa %s10, 0
    %12 = vsyncpa [#allocation6], 0
    %13 = vsyncpa [#allocation4], 0
    %s14 = scalar_lea.sflag [#allocation4], 1
    %15 = vsyncpa %s14, 0
    loop: start=0, step=1, limit=5
    $region2: #{tpu_custom_call.1} parent=1 // loop_pre_header
      _
    $region3: #{tpu_custom_call.1} parent=1 // loop_header
      %s17 = sphi 0, %s21
      %p18 = scmp.ge.s32.totalorder %s17, 5
      %s27 = sphi 0, %s29
      %s30 = sphi 0, %s27
      %s31 = sphi 0, %s30
      %s47 = sphi 0, %s31
      %s51 = sphi 0, %s51
      %s53 = sphi 0, %s51
      %s54 = sphi 0, %s53
      %s68 = sphi 0, %s54
      %s72 = sphi 0, %s72
      %s74 = sphi 0, %s72
      %s75 = sphi 0, %s74
      %s89 = sphi 0, %s75
      %s95 = sphi 0, %s97
      %s98 = sphi 0, %s95
      %s99 = sphi 0, %s98
      %s115 = sphi 0, %s99
      %s121 = sphi 0, %s123
      %s124 = sphi 0, %s121
      %s125 = sphi 0, %s124
      %s141 = sphi 0, %s125
    $region4: #{tpu_custom_call.1} parent=1 // loop_header_branch
      %20 = sbr.rel (%p18) target = $region8
    $region5: #{tpu_custom_call.1} parent=1 // loop_body
      %s22 = ssub.s32 %s17, 1
      %s23 = ssub.s32 %s17, 2
      %s24 = sadd.s32 %s17, 1
      %s25 = ssub.s32 %s17, %s24
      %p26 = scmp.eq.s32.totalorder %s25, 0
      %s28 = sadd.s32 %s27, 1
      %s29 = scalar_select %p26, %s27, %s28
      %p32 = pneg %p26
      %p33 = scmp.eq.s32.totalorder %s17, 2
      %p34 = por %p32, %p33
      %p35 = scmp.ne.s32.totalorder %s27, %s30
      %p36 = scmp.eq.s32.totalorder %s17, 0
      %p37 = por %p35, %p36
      %p38 = scmp.ne.s32.totalorder %s27, %s30
      %p39 = scmp.eq.s32.totalorder %s22, 2
      %p40 = por %p38, %p39
      %p41 = scmp.ne.s32.totalorder %s30, %s31
      %p42 = scmp.eq.s32.totalorder %s22, 0
      %p43 = por %p41, %p42
      %p44 = scmp.ne.s32.totalorder %s30, %s31
      %p45 = scmp.eq.s32.totalorder %s23, 2
      %p46 = por %p44, %p45
      %p48 = scmp.ne.s32.totalorder %s31, %s47
      %p49 = scmp.eq.s32.totalorder %s23, 0
      %p50 = por %p48, %p49
      %s52 = sadd.s32 %s51, 1
      %p55 = scmp.eq.s32.totalorder %s17, 2
      %p56 = scmp.ne.s32.totalorder %s51, %s53
      %p57 = scmp.eq.s32.totalorder %s17, 0
      %p58 = por %p56, %p57
      %p59 = scmp.ne.s32.totalorder %s51, %s53
      %p60 = scmp.eq.s32.totalorder %s22, 2
      %p61 = por %p59, %p60
      %p62 = scmp.ne.s32.totalorder %s53, %s54
      %p63 = scmp.eq.s32.totalorder %s22, 0
      %p64 = por %p62, %p63
      %p65 = scmp.ne.s32.totalorder %s53, %s54
      %p66 = scmp.eq.s32.totalorder %s23, 2
      %p67 = por %p65, %p66
      %p69 = scmp.ne.s32.totalorder %s54, %s68
      %p70 = scmp.eq.s32.totalorder %s23, 0
      %p71 = por %p69, %p70
      %s73 = sadd.s32 %s72, 1
      %p76 = scmp.eq.s32.totalorder %s17, 2
      %p77 = scmp.ne.s32.totalorder %s72, %s74
      %p78 = scmp.eq.s32.totalorder %s17, 0
      %p79 = por %p77, %p78
      %p80 = scmp.ne.s32.totalorder %s72, %s74
      %p81 = scmp.eq.s32.totalorder %s22, 2
      %p82 = por %p80, %p81
      %p83 = scmp.ne.s32.totalorder %s74, %s75
      %p84 = scmp.eq.s32.totalorder %s22, 0
      %p85 = por %p83, %p84
      %p86 = scmp.ne.s32.totalorder %s74, %s75
      %p87 = scmp.eq.s32.totalorder %s23, 2
      %p88 = por %p86, %p87
      %p90 = scmp.ne.s32.totalorder %s75, %s89
      %p91 = scmp.eq.s32.totalorder %s23, 0
      %p92 = por %p90, %p91
      %s93 = ssub.s32 %s17, %s24
      %p94 = scmp.eq.s32.totalorder %s93, 0
      %s96 = sadd.s32 %s95, 1
      %s97 = scalar_select %p94, %s95, %s96
      %p100 = pneg %p94
      %p101 = scmp.eq.s32.totalorder %s17, 2
      %p102 = por %p100, %p101
      %p103 = scmp.ne.s32.totalorder %s95, %s98
      %p104 = scmp.eq.s32.totalorder %s17, 0
      %p105 = por %p103, %p104
      %p106 = scmp.ne.s32.totalorder %s95, %s98
      %p107 = scmp.eq.s32.totalorder %s22, 2
      %p108 = por %p106, %p107
      %p109 = scmp.ne.s32.totalorder %s98, %s99
      %p110 = scmp.eq.s32.totalorder %s22, 0
      %p111 = por %p109, %p110
      %p112 = scmp.ne.s32.totalorder %s98, %s99
      %p113 = scmp.eq.s32.totalorder %s23, 2
      %p114 = por %p112, %p113
      %p116 = scmp.ne.s32.totalorder %s99, %s115
      %p117 = scmp.eq.s32.totalorder %s23, 0
      %p118 = por %p116, %p117
      %s119 = ssub.s32 %s17, %s24
      %p120 = scmp.eq.s32.totalorder %s119, 0
      %s122 = sadd.s32 %s121, 1
      %s123 = scalar_select %p120, %s121, %s122
      %p126 = pneg %p120
      %p127 = scmp.eq.s32.totalorder %s17, 2
      %p128 = por %p126, %p127
      %p129 = scmp.ne.s32.totalorder %s121, %s124
      %p130 = scmp.eq.s32.totalorder %s17, 0
      %p131 = por %p129, %p130
      %p132 = scmp.ne.s32.totalorder %s121, %s124
      %p133 = scmp.eq.s32.totalorder %s22, 2
      %p134 = por %p132, %p133
      %p135 = scmp.ne.s32.totalorder %s124, %s125
      %p136 = scmp.eq.s32.totalorder %s22, 0
      %p137 = por %p135, %p136
      %p138 = scmp.ne.s32.totalorder %s124, %s125
      %p139 = scmp.eq.s32.totalorder %s23, 2
      %p140 = por %p138, %p139
      %p142 = scmp.ne.s32.totalorder %s125, %s141
      %p143 = scmp.eq.s32.totalorder %s23, 0
      %p144 = por %p142, %p143
      %p145 = scmp.le.s32.totalorder 1, %s17
      %p146 = scmp.lt.s32.totalorder %s17, 4
      %p147 = pnand %p145, %p146
      %p148 = pneg %p147
      // Predicated region
      $region9: #{tpu_custom_call.1} parent=5 // pred_check
        _
      $region10: #{tpu_custom_call.1} parent=5 // pred_check_branch
        %150 = sbr.rel (%p147) target = $region12
      $region11: #{tpu_custom_call.1} parent=5 // pred_region
        %s151 = ssub.s32 %s17, 1
        // Predicated region
        $region13: #{tpu_custom_call.1} parent=11 // pred_check
          %p152 = pneg %p64
        $region14: #{tpu_custom_call.1} parent=11 // pred_check_branch
          %154 = sbr.rel (%p152) target = $region16
        $region15: #{tpu_custom_call.1} parent=11 // pred_region
          %s156 = ssub.s32 4096, 4096
          %157 = vsyncadd [#allocation6], %s156
          %s158 = sshll.u32 [#allocation5], 4
          %s159 = int_to_ptr.vmem [resolvable:$true] %s158
          %164 = dma.hbm_to_vmem [thread:$0]  %s1, 4096, %s159, [#allocation6], 64, 64, 4
        $region16: #{tpu_custom_call.1} parent=11 // pred_fallthru
          _
        // Predicated region
        $region17: #{tpu_custom_call.1} parent=11 // pred_check
          %p165 = pneg %p85
        $region18: #{tpu_custom_call.1} parent=11 // pred_check_branch
          %167 = sbr.rel (%p165) target = $region20
        $region19: #{tpu_custom_call.1} parent=11 // pred_region
          _
        $region20: #{tpu_custom_call.1} parent=11 // pred_fallthru
          _
      $region12: #{tpu_custom_call.1} parent=5 // pred_fallthru
        _
      %p168 = scmp.lt.s32.totalorder %s17, 3
      // Predicated region
      $region21: #{tpu_custom_call.1} parent=5 // pred_check
        %p169 = pneg %p168
      $region22: #{tpu_custom_call.1} parent=5 // pred_check_branch
        %171 = sbr.rel (%p169) target = $region24
      $region23: #{tpu_custom_call.1} parent=5 // pred_region
        // Predicated region
        $region25: #{tpu_custom_call.1} parent=23 // pred_check
          %p172 = pneg %p37
        $region26: #{tpu_custom_call.1} parent=23 // pred_check_branch
          %174 = sbr.rel (%p172) target = $region28
        $region27: #{tpu_custom_call.1} parent=23 // pred_region
          %s175 = sand.u32 %s17, 1
          %s176 = scalar_lea.sflag [#allocation3], %s175
          %s177 = sand.u32 %s27, 1
          %s178 = smul.addr %s177, 256
          %s179 = scalar_lea.vmem [#allocation2], %s178
          %s180 = smul.u32 8, %s17
          %s181 = ssub.s32 18, %s180
          %p182 = scmp.lt.s32.totalorder %s181, 8
          %s183 = scalar_select %p182, %s181, 8
          %s184 = smul.u32 128, %s183
          %s185 = smul.u32 %s184, 4
          %s187 = ssub.s32 4096, %s185
          %188 = vsyncadd %s176, %s187
          %p189 = scmp.ne.s32.totalorder 0, %s185
          %s190 = smul.addr %s180, 4
          %s191 = smul.addr %s190, 128
          %s192 = scalar_lea.hbm %s0, %s191
          %s193 = smul.u32 32, %s183
          %s194 = sshll.u32 %s179, 4
          %s195 = int_to_ptr.vmem [resolvable:$true] %s194
          %s196 = sshll.u32 %s193, 4
          %200 = dma.hbm_to_vmem [thread:$0]  (%p189), %s192, %s196, %s195, %s176, 512, 512, 32
        $region28: #{tpu_custom_call.1} parent=23 // pred_fallthru
          _
        // Predicated region
        $region29: #{tpu_custom_call.1} parent=23 // pred_check
          %p201 = pneg %p105
        $region30: #{tpu_custom_call.1} parent=23 // pred_check_branch
          %203 = sbr.rel (%p201) target = $region32
        $region31: #{tpu_custom_call.1} parent=23 // pred_region
          %s204 = sand.u32 %s17, 1
          %s205 = scalar_lea.sflag [#allocation3], %s204
          %s206 = sand.u32 %s95, 1
          %s207 = smul.addr %s206, 64
          %s208 = scalar_lea.vmem [#allocation7], %s207
          %s209 = smul.u32 8, %s17
          %s210 = ssub.s32 18, %s209
          %p211 = scmp.lt.s32.totalorder %s210, 8
          %s212 = scalar_select %p211, %s210, 8
          %s213 = smul.u32 128, %s212
          %s215 = ssub.s32 1024, %s213
          %216 = vsyncadd %s205, %s215
          %p217 = scmp.ne.s32.totalorder 0, %s213
          %s218 = smul.addr %s209, 128
          %s219 = scalar_lea.hbm %s3, %s218
          %s220 = smul.u32 8, %s212
          %s221 = sshll.u32 %s208, 4
          %s222 = int_to_ptr.vmem [resolvable:$true] %s221
          %s223 = sshll.u32 %s220, 4
          %227 = dma.hbm_to_vmem [thread:$0]  (%p217), %s219, %s223, %s222, %s205, 128, 128, 8
        $region32: #{tpu_custom_call.1} parent=23 // pred_fallthru
          _
      $region24: #{tpu_custom_call.1} parent=5 // pred_fallthru
        _
      %p228 = scmp.le.s32.totalorder 1, %s17
      %p229 = scmp.lt.s32.totalorder %s17, 4
      %p230 = pnand %p228, %p229
      %p231 = pneg %p230
      // Predicated region
      $region33: #{tpu_custom_call.1} parent=5 // pred_check
        _
      $region34: #{tpu_custom_call.1} parent=5 // pred_check_branch
        %233 = sbr.rel (%p230) target = $region36
      $region35: #{tpu_custom_call.1} parent=5 // pred_region
        %s234 = ssub.s32 %s17, 1
        %s235 = sand.u32 %s22, 1
        %s236 = scalar_lea.sflag [#allocation3], %s235
        %s237 = sand.u32 %s30, 1
        %s238 = smul.addr %s237, 256
        %s239 = scalar_lea.vmem [#allocation2], %s238
        // Predicated region
        $region37: #{tpu_custom_call.1} parent=35 // pred_check
          %p240 = pneg %p43
        $region38: #{tpu_custom_call.1} parent=35 // pred_check_branch
          %242 = sbr.rel (%p240) target = $region40
        $region39: #{tpu_custom_call.1} parent=35 // pred_region
          %243 = dma.done %s236, 4096
        $region40: #{tpu_custom_call.1} parent=35 // pred_fallthru
          _
        // Predicated region
        $region41: #{tpu_custom_call.1} parent=35 // pred_check
          %p244 = pneg %p64
        $region42: #{tpu_custom_call.1} parent=35 // pred_check_branch
          %246 = sbr.rel (%p244) target = $region44
        $region43: #{tpu_custom_call.1} parent=35 // pred_region
          %247 = dma.done [#allocation6], 4096
        $region44: #{tpu_custom_call.1} parent=35 // pred_fallthru
          _
        %s248 = sand.u32 %s22, 1
        %s249 = scalar_lea.sflag [#allocation3], %s248
        %s250 = sand.u32 %s98, 1
        %s251 = smul.addr %s250, 64
        %s252 = scalar_lea.vmem [#allocation7], %s251
        // Predicated region
        $region45: #{tpu_custom_call.1} parent=35 // pred_check
          %p253 = pneg %p111
        $region46: #{tpu_custom_call.1} parent=35 // pred_check_branch
          %255 = sbr.rel (%p253) target = $region48
        $region47: #{tpu_custom_call.1} parent=35 // pred_region
          %256 = dma.done %s249, 1024
        $region48: #{tpu_custom_call.1} parent=35 // pred_fallthru
          _
        %s257 = sand.u32 %s22, 1
        %s258 = scalar_lea.sflag [#allocation3], %s257
        %s259 = sand.u32 %s30, 1
        %s260 = smul.addr %s259, 256
        %s261 = scalar_lea.vmem [#allocation2], %s260
        %p262 = pneg %p43
        %p263 = pneg %p40
        %p264 = pneg %p64
        %p265 = pneg %p61
        %p266 = pneg %p85
        %p267 = pneg %p82
        %s268 = sand.u32 %s22, 1
        %s269 = scalar_lea.sflag [#allocation3], %s268
        %s270 = sand.u32 %s98, 1
        %s271 = smul.addr %s270, 64
        %s272 = scalar_lea.vmem [#allocation7], %s271
        %p273 = pneg %p111
        %p274 = pneg %p108
        %p275 = pneg %p137
        %p276 = pneg %p134
        %s277 = sand.u32 %s124, 1
        %s278 = scalar_lea.sflag [#allocation4], %s277
        %s279 = sand.u32 %s124, 1
        %s280 = smul.addr %s279, 64
        %s281 = scalar_lea.vmem [#allocation8], %s280
        %s282 = smul.u32 8, %s22
        %s283 = ssub.s32 18, %s282
        %p284 = scmp.lt.s32.totalorder %s283, 8
        %s285 = scalar_select %p284, %s283, 8
        %s286 = smul.u32 128, %s285
        %s287 = smul.u32 %s286, 4
        %s288 = smul.u32 8, %s22
        %s289 = ssub.s32 18, %s288
        %p290 = scmp.lt.s32.totalorder %s289, 8
        %s291 = scalar_select %p290, %s289, 8
        %s292 = smul.u32 128, %s291
        %s293 = smul.u32 8, %s22
        %s294 = ssub.s32 18, %s293
        %p295 = scmp.lt.s32.totalorder %s294, 8
        %s296 = scalar_select %p295, %s294, 8
        %s297 = smul.u32 128, %s296
        %v299 = vld [vmem:[%s2] sm:$0x7]
        %v300 = vld [vmem:[%s239] sm:$0xff]
        %v301 = vld [vmem:[%s239 + $0x8] sm:$0xff]
        %v302 = vld [vmem:[%s239 + $0x10] sm:$0xff]
        %v303 = vld [vmem:[%s239 + $0x18] sm:$0xff]
        %v304 = vld [vmem:[%s239 + $0x20] sm:$0xff]
        %v305 = vld [vmem:[%s239 + $0x28] sm:$0xff]
        %v306 = vld [vmem:[%s239 + $0x30] sm:$0xff]
        %v307 = vld [vmem:[%s239 + $0x38] sm:$0xff]
        %v308 = vld [vmem:[%s239 + $0x40] sm:$0xff]
        %v309 = vld [vmem:[%s239 + $0x48] sm:$0xff]
        %v310 = vld [vmem:[%s239 + $0x50] sm:$0xff]
        %v311 = vld [vmem:[%s239 + $0x58] sm:$0xff]
        %v312 = vld [vmem:[%s239 + $0x60] sm:$0xff]
        %v313 = vld [vmem:[%s239 + $0x68] sm:$0xff]
        %v314 = vld [vmem:[%s239 + $0x70] sm:$0xff]
        %v315 = vld [vmem:[%s239 + $0x78] sm:$0xff]
        %v316 = vld [vmem:[%s239 + $0x80] sm:$0xff]
        %v317 = vld [vmem:[%s239 + $0x88] sm:$0xff]
        %v318 = vld [vmem:[%s239 + $0x90] sm:$0xff]
        %v319 = vld [vmem:[%s239 + $0x98] sm:$0xff]
        %v320 = vld [vmem:[%s239 + $0xa0] sm:$0xff]
        %v321 = vld [vmem:[%s239 + $0xa8] sm:$0xff]
        %v322 = vld [vmem:[%s239 + $0xb0] sm:$0xff]
        %v323 = vld [vmem:[%s239 + $0xb8] sm:$0xff]
        %v324 = vld [vmem:[%s239 + $0xc0] sm:$0xff]
        %v325 = vld [vmem:[%s239 + $0xc8] sm:$0xff]
        %v326 = vld [vmem:[%s239 + $0xd0] sm:$0xff]
        %v327 = vld [vmem:[%s239 + $0xd8] sm:$0xff]
        %v328 = vld [vmem:[%s239 + $0xe0] sm:$0xff]
        %v329 = vld [vmem:[%s239 + $0xe8] sm:$0xff]
        %v330 = vld [vmem:[%s239 + $0xf0] sm:$0xff]
        %v331 = vld [vmem:[%s239 + $0xf8] sm:$0xff]
        %v332 = vpack.c.bf16 %v304, %v300
        %v333 = vpack.c.bf16 %v305, %v301
        %v334 = vpack.c.bf16 %v306, %v302
        %v335 = vpack.c.bf16 %v307, %v303
        %v336 = vpack.c.bf16 %v312, %v308
        %v337 = vpack.c.bf16 %v313, %v309
        %v338 = vpack.c.bf16 %v314, %v310
        %v339 = vpack.c.bf16 %v315, %v311
        %v340 = vpack.c.bf16 %v320, %v316
        %v341 = vpack.c.bf16 %v321, %v317
        %v342 = vpack.c.bf16 %v322, %v318
        %v343 = vpack.c.bf16 %v323, %v319
        %v344 = vpack.c.bf16 %v328, %v324
        %v345 = vpack.c.bf16 %v329, %v325
        %v346 = vpack.c.bf16 %v330, %v326
        %v347 = vpack.c.bf16 %v331, %v327
        %v348 = vld [vmem:[#allocation5] sm:$0xf]
        %v349 = vld [vmem:[#allocation5 + $0x4] sm:$0xf]
        %v350 = vld [vmem:[#allocation5 + $0x8] sm:$0xf]
        %v351 = vld [vmem:[#allocation5 + $0xc] sm:$0xf]
        %v352 = vld [vmem:[#allocation5 + $0x10] sm:$0xf]
        %v353 = vld [vmem:[#allocation5 + $0x14] sm:$0xf]
        %v354 = vld [vmem:[#allocation5 + $0x18] sm:$0xf]
        %v355 = vld [vmem:[#allocation5 + $0x1c] sm:$0xf]
        %v356 = vld [vmem:[#allocation5 + $0x20] sm:$0xf]
        %v357 = vld [vmem:[#allocation5 + $0x24] sm:$0xf]
        %v358 = vld [vmem:[#allocation5 + $0x28] sm:$0xf]
        %v359 = vld [vmem:[#allocation5 + $0x2c] sm:$0xf]
        %v360 = vld [vmem:[#allocation5 + $0x30] sm:$0xf]
        %v361 = vld [vmem:[#allocation5 + $0x34] sm:$0xf]
        %v362 = vld [vmem:[#allocation5 + $0x38] sm:$0xf]
        %v363 = vld [vmem:[#allocation5 + $0x3c] sm:$0xf]
        %v364 = vld [vmem:[#allocation5 + $0x40] sm:$0xf]
        %v365 = vld [vmem:[#allocation5 + $0x44] sm:$0xf]
        %v366 = vld [vmem:[#allocation5 + $0x48] sm:$0xf]
        %v367 = vld [vmem:[#allocation5 + $0x4c] sm:$0xf]
        %v368 = vld [vmem:[#allocation5 + $0x50] sm:$0xf]
        %v369 = vld [vmem:[#allocation5 + $0x54] sm:$0xf]
        %v370 = vld [vmem:[#allocation5 + $0x58] sm:$0xf]
        %v371 = vld [vmem:[#allocation5 + $0x5c] sm:$0xf]
        %v372 = vld [vmem:[#allocation5 + $0x60] sm:$0xf]
        %v373 = vld [vmem:[#allocation5 + $0x64] sm:$0xf]
        %v374 = vld [vmem:[#allocation5 + $0x68] sm:$0xf]
        %v375 = vld [vmem:[#allocation5 + $0x6c] sm:$0xf]
        %v376 = vld [vmem:[#allocation5 + $0x70] sm:$0xf]
        %v377 = vld [vmem:[#allocation5 + $0x74] sm:$0xf]
        %v378 = vld [vmem:[#allocation5 + $0x78] sm:$0xf]
        %v379 = vld [vmem:[#allocation5 + $0x7c] sm:$0xf]
        %v380 = vld [vmem:[#allocation5 + $0x80] sm:$0xf]
        %v381 = vld [vmem:[#allocation5 + $0x84] sm:$0xf]
        %v382 = vld [vmem:[#allocation5 + $0x88] sm:$0xf]
        %v383 = vld [vmem:[#allocation5 + $0x8c] sm:$0xf]
        %v384 = vld [vmem:[#allocation5 + $0x90] sm:$0xf]
        %v385 = vld [vmem:[#allocation5 + $0x94] sm:$0xf]
        %v386 = vld [vmem:[#allocation5 + $0x98] sm:$0xf]
        %v387 = vld [vmem:[#allocation5 + $0x9c] sm:$0xf]
        %v388 = vld [vmem:[#allocation5 + $0xa0] sm:$0xf]
        %v389 = vld [vmem:[#allocation5 + $0xa4] sm:$0xf]
        %v390 = vld [vmem:[#allocation5 + $0xa8] sm:$0xf]
        %v391 = vld [vmem:[#allocation5 + $0xac] sm:$0xf]
        %v392 = vld [vmem:[#allocation5 + $0xb0] sm:$0xf]
        %v393 = vld [vmem:[#allocation5 + $0xb4] sm:$0xf]
        %v394 = vld [vmem:[#allocation5 + $0xb8] sm:$0xf]
        %v395 = vld [vmem:[#allocation5 + $0xbc] sm:$0xf]
        %v396 = vld [vmem:[#allocation5 + $0xc0] sm:$0xf]
        %v397 = vld [vmem:[#allocation5 + $0xc4] sm:$0xf]
        %v398 = vld [vmem:[#allocation5 + $0xc8] sm:$0xf]
        %v399 = vld [vmem:[#allocation5 + $0xcc] sm:$0xf]
        %v400 = vld [vmem:[#allocation5 + $0xd0] sm:$0xf]
        %v401 = vld [vmem:[#allocation5 + $0xd4] sm:$0xf]
        %v402 = vld [vmem:[#allocation5 + $0xd8] sm:$0xf]
        %v403 = vld [vmem:[#allocation5 + $0xdc] sm:$0xf]
        %v404 = vld [vmem:[#allocation5 + $0xe0] sm:$0xf]
        %v405 = vld [vmem:[#allocation5 + $0xe4] sm:$0xf]
        %v406 = vld [vmem:[#allocation5 + $0xe8] sm:$0xf]
        %v407 = vld [vmem:[#allocation5 + $0xec] sm:$0xf]
        %v408 = vld [vmem:[#allocation5 + $0xf0] sm:$0xf]
        %v409 = vld [vmem:[#allocation5 + $0xf4] sm:$0xf]
        %v410 = vld [vmem:[#allocation5 + $0xf8] sm:$0xf]
        %v411 = vld [vmem:[#allocation5 + $0xfc] sm:$0xf]
        %v412 = vlaneseq
        %v413 = vshrl.u32 %v412, 7
        %v414 = vsub.s32 0, %v413
        %v415 = vrot.slane %v299, %v414
        %v480 = vunpack.c.l.b16 %v348
        %v481 = vunpack.c.l.b16 %v349
        %v482 = vunpack.c.l.b16 %v350
        %v483 = vunpack.c.l.b16 %v351
        %v484 = vunpack.c.l.b16 %v352
        %v485 = vunpack.c.l.b16 %v353
        %v486 = vunpack.c.l.b16 %v354
        %v487 = vunpack.c.l.b16 %v355
        %v488 = vunpack.c.l.b16 %v356
        %v489 = vunpack.c.l.b16 %v357
        %v490 = vunpack.c.l.b16 %v358
        %v491 = vunpack.c.l.b16 %v359
        %v492 = vunpack.c.l.b16 %v360
        %v493 = vunpack.c.l.b16 %v361
        %v494 = vunpack.c.l.b16 %v362
        %v495 = vunpack.c.l.b16 %v363
        %v496 = vunpack.c.l.b16 %v364
        %v497 = vunpack.c.l.b16 %v365
        %v498 = vunpack.c.l.b16 %v366
        %v499 = vunpack.c.l.b16 %v367
        %v500 = vunpack.c.l.b16 %v368
        %v501 = vunpack.c.l.b16 %v369
        %v502 = vunpack.c.l.b16 %v370
        %v503 = vunpack.c.l.b16 %v371
        %v504 = vunpack.c.l.b16 %v372
        %v505 = vunpack.c.l.b16 %v373
        %v506 = vunpack.c.l.b16 %v374
        %v507 = vunpack.c.l.b16 %v375
        %v508 = vunpack.c.l.b16 %v376
        %v509 = vunpack.c.l.b16 %v377
        %v510 = vunpack.c.l.b16 %v378
        %v511 = vunpack.c.l.b16 %v379
        %v512 = vunpack.c.l.b16 %v380
        %v513 = vunpack.c.l.b16 %v381
        %v514 = vunpack.c.l.b16 %v382
        %v515 = vunpack.c.l.b16 %v383
        %v516 = vunpack.c.l.b16 %v384
        %v517 = vunpack.c.l.b16 %v385
        %v518 = vunpack.c.l.b16 %v386
        %v519 = vunpack.c.l.b16 %v387
        %v520 = vunpack.c.l.b16 %v388
        %v521 = vunpack.c.l.b16 %v389
        %v522 = vunpack.c.l.b16 %v390
        %v523 = vunpack.c.l.b16 %v391
        %v524 = vunpack.c.l.b16 %v392
        %v525 = vunpack.c.l.b16 %v393
        %v526 = vunpack.c.l.b16 %v394
        %v527 = vunpack.c.l.b16 %v395
        %v528 = vunpack.c.l.b16 %v396
        %v529 = vunpack.c.l.b16 %v397
        %v530 = vunpack.c.l.b16 %v398
        %v531 = vunpack.c.l.b16 %v399
        %v532 = vunpack.c.l.b16 %v400
        %v533 = vunpack.c.l.b16 %v401
        %v534 = vunpack.c.l.b16 %v402
        %v535 = vunpack.c.l.b16 %v403
        %v536 = vunpack.c.l.b16 %v404
        %v537 = vunpack.c.l.b16 %v405
        %v538 = vunpack.c.l.b16 %v406
        %v539 = vunpack.c.l.b16 %v407
        %v540 = vunpack.c.l.b16 %v408
        %v541 = vunpack.c.l.b16 %v409
        %v542 = vunpack.c.l.b16 %v410
        %v543 = vunpack.c.l.b16 %v411
        %v544 = vpack.c.b16 %v481, %v480
        %v545 = vpack.c.b16 %v483, %v482
        %v546 = vpack.c.b16 %v485, %v484
        %v547 = vpack.c.b16 %v487, %v486
        %v548 = vpack.c.b16 %v489, %v488
        %v549 = vpack.c.b16 %v491, %v490
        %v550 = vpack.c.b16 %v493, %v492
        %v551 = vpack.c.b16 %v495, %v494
        %v552 = vpack.c.b16 %v497, %v496
        %v553 = vpack.c.b16 %v499, %v498
        %v554 = vpack.c.b16 %v501, %v500
        %v555 = vpack.c.b16 %v503, %v502
        %v556 = vpack.c.b16 %v505, %v504
        %v557 = vpack.c.b16 %v507, %v506
        %v558 = vpack.c.b16 %v509, %v508
        %v559 = vpack.c.b16 %v511, %v510
        %v560 = vpack.c.b16 %v513, %v512
        %v561 = vpack.c.b16 %v515, %v514
        %v562 = vpack.c.b16 %v517, %v516
        %v563 = vpack.c.b16 %v519, %v518
        %v564 = vpack.c.b16 %v521, %v520
        %v565 = vpack.c.b16 %v523, %v522
        %v566 = vpack.c.b16 %v525, %v524
        %v567 = vpack.c.b16 %v527, %v526
        %v568 = vpack.c.b16 %v529, %v528
        %v569 = vpack.c.b16 %v531, %v530
        %v570 = vpack.c.b16 %v533, %v532
        %v571 = vpack.c.b16 %v535, %v534
        %v572 = vpack.c.b16 %v537, %v536
        %v573 = vpack.c.b16 %v539, %v538
        %v574 = vpack.c.b16 %v541, %v540
        %v575 = vpack.c.b16 %v543, %v542
        %608 = vmatprep.subr.bf16.mxu0 0
        %609 = vmatpush1.bf16.msra.mxu0 %v544
        %610 = vmatprep.subr.bf16.mxu0 0
        %611 = vmatpush1.bf16.msra.mxu0 %v545
        %612 = vmatprep.subr.bf16.mxu0 0
        %613 = vmatpush1.bf16.msra.mxu0 %v546
        %614 = vmatprep.subr.bf16.mxu0 0
        %615 = vmatpush1.bf16.msra.mxu0 %v547
        %616 = vmatprep.subr.bf16.mxu0 0
        %617 = vmatpush1.bf16.msra.mxu0 %v548
        %618 = vmatprep.subr.bf16.mxu0 0
        %619 = vmatpush1.bf16.msra.mxu0 %v549
        %620 = vmatprep.subr.bf16.mxu0 0
        %621 = vmatpush1.bf16.msra.mxu0 %v550
        %622 = vmatprep.subr.bf16.mxu0 0
        %623 = vmatpush1.bf16.msra.mxu0 %v551
        %624 = vmatprep.subr.bf16.mxu0 0
        %625 = vmatpush1.bf16.msra.mxu0 %v552
        %626 = vmatprep.subr.bf16.mxu0 0
        %627 = vmatpush1.bf16.msra.mxu0 %v553
        %628 = vmatprep.subr.bf16.mxu0 0
        %629 = vmatpush1.bf16.msra.mxu0 %v554
        %630 = vmatprep.subr.bf16.mxu0 0
        %631 = vmatpush1.bf16.msra.mxu0 %v555
        %632 = vmatprep.subr.bf16.mxu0 0
        %633 = vmatpush1.bf16.msra.mxu0 %v556
        %634 = vmatprep.subr.bf16.mxu0 0
        %635 = vmatpush1.bf16.msra.mxu0 %v557
        %636 = vmatprep.subr.bf16.mxu0 0
        %637 = vmatpush1.bf16.msra.mxu0 %v558
        %638 = vmatprep.subr.bf16.mxu0 0
        %639 = vmatpush1.bf16.msra.mxu0 %v559
        %640 = vmatprep.mubr.bf16.mxu0 %v333
        %641 = vmatmul.mubr.bf16.gmra.mrb[0].mxu0 %v332
        %v642 = vpop.f32.mrb[0].mxu0
        %v643 = vadd.f32 %v415, %v642
        %v644 = vpop.f32.mrb[0].mxu0
        %v645 = vpop.f32.mrb[0].mxu0
        %v646 = vadd.f32 %v415, %v645
        %v647 = vpop.f32.mrb[0].mxu0
        %648 = vmatprep.mubr.bf16.mxu0 %v337
        %649 = vmatmul.mubr.bf16.gmra.mrb[0].mxu0 %v336
        %v650 = vpop.f32.mrb[0].mxu0
        %v651 = vadd.f32 %v415, %v650
        %v652 = vpop.f32.mrb[0].mxu0
        %v653 = vpop.f32.mrb[0].mxu0
        %v654 = vadd.f32 %v415, %v653
        %v655 = vpop.f32.mrb[0].mxu0
        %656 = vmatprep.mubr.bf16.mxu0 %v341
        %657 = vmatmul.mubr.bf16.gmra.mrb[0].mxu0 %v340
        %v658 = vpop.f32.mrb[0].mxu0
        %v659 = vadd.f32 %v415, %v658
        %v660 = vpop.f32.mrb[0].mxu0
        %v661 = vpop.f32.mrb[0].mxu0
        %v662 = vadd.f32 %v415, %v661
        %v663 = vpop.f32.mrb[0].mxu0
        %664 = vmatprep.mubr.bf16.mxu0 %v345
        %665 = vmatmul.mubr.bf16.gmra.mrb[0].mxu0 %v344
        %v666 = vpop.f32.mrb[0].mxu0
        %v667 = vadd.f32 %v415, %v666
        %v668 = vpop.f32.mrb[0].mxu0
        %v669 = vpop.f32.mrb[0].mxu0
        %v670 = vadd.f32 %v415, %v669
        %v671 = vpop.f32.mrb[0].mxu0
        %672 = vdwg.mxu0
        %673 = vmatprep.subr.bf16.mxu0 0
        %674 = vmatpush1.bf16.msra.mxu0 %v560
        %675 = vmatprep.subr.bf16.mxu0 0
        %676 = vmatpush1.bf16.msra.mxu0 %v561
        %677 = vmatprep.subr.bf16.mxu0 0
        %678 = vmatpush1.bf16.msra.mxu0 %v562
        %679 = vmatprep.subr.bf16.mxu0 0
        %680 = vmatpush1.bf16.msra.mxu0 %v563
        %681 = vmatprep.subr.bf16.mxu0 0
        %682 = vmatpush1.bf16.msra.mxu0 %v564
        %683 = vmatprep.subr.bf16.mxu0 0
        %684 = vmatpush1.bf16.msra.mxu0 %v565
        %685 = vmatprep.subr.bf16.mxu0 0
        %686 = vmatpush1.bf16.msra.mxu0 %v566
        %687 = vmatprep.subr.bf16.mxu0 0
        %688 = vmatpush1.bf16.msra.mxu0 %v567
        %689 = vmatprep.subr.bf16.mxu0 0
        %690 = vmatpush1.bf16.msra.mxu0 %v568
        %691 = vmatprep.subr.bf16.mxu0 0
        %692 = vmatpush1.bf16.msra.mxu0 %v569
        %693 = vmatprep.subr.bf16.mxu0 0
        %694 = vmatpush1.bf16.msra.mxu0 %v570
        %695 = vmatprep.subr.bf16.mxu0 0
        %696 = vmatpush1.bf16.msra.mxu0 %v571
        %697 = vmatprep.subr.bf16.mxu0 0
        %698 = vmatpush1.bf16.msra.mxu0 %v572
        %699 = vmatprep.subr.bf16.mxu0 0
        %700 = vmatpush1.bf16.msra.mxu0 %v573
        %701 = vmatprep.subr.bf16.mxu0 0
        %702 = vmatpush1.bf16.msra.mxu0 %v574
        %703 = vmatprep.subr.bf16.mxu0 0
        %704 = vmatpush1.bf16.msra.mxu0 %v575
        %705 = vmatprep.mubr.bf16.mxu0 %v335
        %706 = vmatmul.mubr.bf16.gmra.mrb[0].mxu0 %v334
        %v707 = vpop.f32.mrb[0].mxu0
        %v708 = vadd.f32 %v643, %v707
        %v709 = vpop.f32.mrb[0].mxu0
        %v710 = vpop.f32.mrb[0].mxu0
        %v711 = vadd.f32 %v646, %v710
        %v712 = vpop.f32.mrb[0].mxu0
        %713 = vmatprep.mubr.bf16.mxu0 %v339
        %714 = vmatmul.mubr.bf16.gmra.mrb[0].mxu0 %v338
        %v715 = vpop.f32.mrb[0].mxu0
        %v716 = vadd.f32 %v651, %v715
        %v717 = vpop.f32.mrb[0].mxu0
        %v718 = vpop.f32.mrb[0].mxu0
        %v719 = vadd.f32 %v654, %v718
        %v720 = vpop.f32.mrb[0].mxu0
        %721 = vmatprep.mubr.bf16.mxu0 %v343
        %722 = vmatmul.mubr.bf16.gmra.mrb[0].mxu0 %v342
        %v723 = vpop.f32.mrb[0].mxu0
        %v724 = vadd.f32 %v659, %v723
        %v725 = vpop.f32.mrb[0].mxu0
        %v726 = vpop.f32.mrb[0].mxu0
        %v727 = vadd.f32 %v662, %v726
        %v728 = vpop.f32.mrb[0].mxu0
        %729 = vmatprep.mubr.bf16.mxu0 %v347
        %730 = vmatmul.mubr.bf16.gmra.mrb[0].mxu0 %v346
        %v731 = vpop.f32.mrb[0].mxu0
        %v732 = vadd.f32 %v667, %v731
        %v733 = vpop.f32.mrb[0].mxu0
        %v734 = vpop.f32.mrb[0].mxu0
        %v735 = vadd.f32 %v670, %v734
        %v736 = vpop.f32.mrb[0].mxu0
        %737 = vdwg.mxu0
        %v738 = vld [vmem:[%s252] sm:$0xff]
        %v739 = vld [vmem:[%s252 + $0x8] sm:$0xff]
        %v740 = vld [vmem:[%s252 + $0x10] sm:$0xff]
        %v741 = vld [vmem:[%s252 + $0x18] sm:$0xff]
        %v742 = vld [vmem:[%s252 + $0x20] sm:$0xff]
        %v743 = vld [vmem:[%s252 + $0x28] sm:$0xff]
        %v744 = vld [vmem:[%s252 + $0x30] sm:$0xff]
        %v745 = vld [vmem:[%s252 + $0x38] sm:$0xff]
        %v746 = vadd.f32 %v708, %v738
        %v747 = vadd.f32 %v711, %v739
        %v748 = vadd.f32 %v716, %v740
        %v749 = vadd.f32 %v719, %v741
        %v750 = vadd.f32 %v724, %v742
        %v751 = vadd.f32 %v727, %v743
        %v752 = vadd.f32 %v732, %v744
        %v753 = vadd.f32 %v735, %v745
        %754 = vadd.xlane.f32.xlu0 %v746
        %v755 = vpop.xlane.xlu0 %754
        %756 = vadd.xlane.f32.xlu0 %v747
        %v757 = vpop.xlane.xlu0 %756
        %758 = vadd.xlane.f32.xlu0 %v748
        %v759 = vpop.xlane.xlu0 %758
        %760 = vadd.xlane.f32.xlu0 %v749
        %v761 = vpop.xlane.xlu0 %760
        %762 = vadd.xlane.f32.xlu0 %v750
        %v763 = vpop.xlane.xlu0 %762
        %764 = vadd.xlane.f32.xlu0 %v751
        %v765 = vpop.xlane.xlu0 %764
        %766 = vadd.xlane.f32.xlu0 %v752
        %v767 = vpop.xlane.xlu0 %766
        %768 = vadd.xlane.f32.xlu0 %v753
        %v769 = vpop.xlane.xlu0 %768
        %v770 = vrcp.pop 128.0
        %v771 = vmul.f32 %v755, %v770
        %v772 = vmul.f32 %v757, %v770
        %v773 = vmul.f32 %v759, %v770
        %v774 = vmul.f32 %v761, %v770
        %v775 = vmul.f32 %v763, %v770
        %v776 = vmul.f32 %v765, %v770
        %v777 = vmul.f32 %v767, %v770
        %v778 = vmul.f32 %v769, %v770
        %v779 = vsub.f32 %v746, %v771
        %v780 = vsub.f32 %v747, %v772
        %v781 = vsub.f32 %v748, %v773
        %v782 = vsub.f32 %v749, %v774
        %v783 = vsub.f32 %v750, %v775
        %v784 = vsub.f32 %v751, %v776
        %v785 = vsub.f32 %v752, %v777
        %v786 = vsub.f32 %v753, %v778
        %v787 = vmul.f32 %v779, %v779
        %v788 = vmul.f32 %v780, %v780
        %v789 = vmul.f32 %v781, %v781
        %v790 = vmul.f32 %v782, %v782
        %v791 = vmul.f32 %v783, %v783
        %v792 = vmul.f32 %v784, %v784
        %v793 = vmul.f32 %v785, %v785
        %v794 = vmul.f32 %v786, %v786
        %795 = vadd.xlane.f32.xlu0 %v787
        %v796 = vpop.xlane.xlu0 %795
        %797 = vadd.xlane.f32.xlu0 %v788
        %v798 = vpop.xlane.xlu0 %797
        %799 = vadd.xlane.f32.xlu0 %v789
        %v800 = vpop.xlane.xlu0 %799
        %801 = vadd.xlane.f32.xlu0 %v790
        %v802 = vpop.xlane.xlu0 %801
        %803 = vadd.xlane.f32.xlu0 %v791
        %v804 = vpop.xlane.xlu0 %803
        %805 = vadd.xlane.f32.xlu0 %v792
        %v806 = vpop.xlane.xlu0 %805
        %807 = vadd.xlane.f32.xlu0 %v793
        %v808 = vpop.xlane.xlu0 %807
        %809 = vadd.xlane.f32.xlu0 %v794
        %v810 = vpop.xlane.xlu0 %809
        %v811 = vmul.f32 %v796, %v770
        %v812 = vmul.f32 %v798, %v770
        %v813 = vmul.f32 %v800, %v770
        %v814 = vmul.f32 %v802, %v770
        %v815 = vmul.f32 %v804, %v770
        %v816 = vmul.f32 %v806, %v770
        %v817 = vmul.f32 %v808, %v770
        %v818 = vmul.f32 %v810, %v770
        %v819 = vadd.f32 %v811, 1e-12
        %v820 = vadd.f32 %v812, 1e-12
        %v821 = vadd.f32 %v813, 1e-12
        %v822 = vadd.f32 %v814, 1e-12
        %v823 = vadd.f32 %v815, 1e-12
        %v824 = vadd.f32 %v816, 1e-12
        %v825 = vadd.f32 %v817, 1e-12
        %v826 = vadd.f32 %v818, 1e-12
        %v827 = vrsqrt.pop %v819
        %v828 = vrsqrt.pop %v820
        %v829 = vrsqrt.pop %v821
        %v830 = vrsqrt.pop %v822
        %v831 = vrsqrt.pop %v823
        %v832 = vrsqrt.pop %v824
        %v833 = vrsqrt.pop %v825
        %v834 = vrsqrt.pop %v826
        %v835 = vmul.f32 %v779, %v827
        %v836 = vmul.f32 %v780, %v828
        %v837 = vmul.f32 %v781, %v829
        %v838 = vmul.f32 %v782, %v830
        %v839 = vmul.f32 %v783, %v831
        %v840 = vmul.f32 %v784, %v832
        %v841 = vmul.f32 %v785, %v833
        %v842 = vmul.f32 %v786, %v834
        %v843 = vlaneseq
        %v844 = vshrl.u32 %v843, 7
        %v845 = vsub.s32 1, %v844
        %v846 = vrot.slane %v299, %v845
        %v847 = vmul.f32 %v835, %v846
        %v848 = vmul.f32 %v836, %v846
        %v849 = vmul.f32 %v837, %v846
        %v850 = vmul.f32 %v838, %v846
        %v851 = vmul.f32 %v839, %v846
        %v852 = vmul.f32 %v840, %v846
        %v853 = vmul.f32 %v841, %v846
        %v854 = vmul.f32 %v842, %v846
        %v855 = vlaneseq
        %v856 = vshrl.u32 %v855, 7
        %v857 = vsub.s32 2, %v856
        %v858 = vrot.slane %v299, %v857
        %v859 = vadd.f32 %v847, %v858
        %v860 = vadd.f32 %v848, %v858
        %v861 = vadd.f32 %v849, %v858
        %v862 = vadd.f32 %v850, %v858
        %v863 = vadd.f32 %v851, %v858
        %v864 = vadd.f32 %v852, %v858
        %v865 = vadd.f32 %v853, %v858
        %v866 = vadd.f32 %v854, %v858
        %867 = vst [vmem:[%s281] sm:$0xff] %v859
        %868 = vst [vmem:[%s281 + $0x8] sm:$0xff] %v860
        %869 = vst [vmem:[%s281 + $0x10] sm:$0xff] %v861
        %870 = vst [vmem:[%s281 + $0x18] sm:$0xff] %v862
        %871 = vst [vmem:[%s281 + $0x20] sm:$0xff] %v863
        %872 = vst [vmem:[%s281 + $0x28] sm:$0xff] %v864
        %873 = vst [vmem:[%s281 + $0x30] sm:$0xff] %v865
        %874 = vst [vmem:[%s281 + $0x38] sm:$0xff] %v866
        %s875 = sand.u32 %s124, 1
        %s876 = scalar_lea.sflag [#allocation4], %s875
        %s877 = sand.u32 %s124, 1
        %s878 = smul.addr %s877, 64
        %s879 = scalar_lea.vmem [#allocation8], %s878
        // Predicated region
        $region49: #{tpu_custom_call.1} parent=35 // pred_check
          %p880 = pneg %p134
        $region50: #{tpu_custom_call.1} parent=35 // pred_check_branch
          %882 = sbr.rel (%p880) target = $region52
        $region51: #{tpu_custom_call.1} parent=35 // pred_region
          %s883 = smul.u32 8, %s22
          %s884 = ssub.s32 18, %s883
          %p885 = scmp.lt.s32.totalorder %s884, 8
          %s886 = scalar_select %p885, %s884, 8
          %s887 = smul.u32 128, %s886
          %s889 = ssub.s32 1024, %s887
          %890 = vsyncadd %s876, %s889
          %p891 = scmp.ne.s32.totalorder 0, %s887
          %s892 = smul.addr %s883, 128
          %s893 = scalar_lea.hbm %s4, %s892
          %s894 = smul.u32 8, %s886
          %s895 = sshll.u32 %s879, 4
          %s896 = int_to_ptr.vmem [resolvable:$true] %s895
          %s897 = sshll.u32 %s894, 4
          %901 = dma.vmem_to_hbm [thread:$0]  (%p891), %s896, %s897, %s893, %s876, 128, 128, 8
        $region52: #{tpu_custom_call.1} parent=35 // pred_fallthru
          _
      $region36: #{tpu_custom_call.1} parent=5 // pred_fallthru
        _
      %p902 = scmp.le.s32.totalorder 2, %s17
      // Predicated region
      $region53: #{tpu_custom_call.1} parent=5 // pred_check
        %p903 = pneg %p902
      $region54: #{tpu_custom_call.1} parent=5 // pred_check_branch
        %905 = sbr.rel (%p903) target = $region56
      $region55: #{tpu_custom_call.1} parent=5 // pred_region
        %s906 = ssub.s32 %s17, 2
        // Predicated region
        $region57: #{tpu_custom_call.1} parent=55 // pred_check
          %p907 = pneg %p140
        $region58: #{tpu_custom_call.1} parent=55 // pred_check_branch
          %909 = sbr.rel (%p907) target = $region60
        $region59: #{tpu_custom_call.1} parent=55 // pred_region
          %s910 = sand.u32 %s125, 1
          %s911 = scalar_lea.sflag [#allocation4], %s910
          %s912 = sand.u32 %s125, 1
          %s913 = smul.addr %s912, 64
          %s914 = scalar_lea.vmem [#allocation8], %s913
          %915 = dma.done %s911, 1024
        $region60: #{tpu_custom_call.1} parent=55 // pred_fallthru
          _
      $region56: #{tpu_custom_call.1} parent=5 // pred_fallthru
        _
    $region6: #{tpu_custom_call.1} parent=1 // loop_footer
      %s21 = sadd.s32 1, %s17
    $region7: #{tpu_custom_call.1} parent=1 // loop_footer_branch
      %16 = sbr.rel target = $region3
    $region8: #{tpu_custom_call.1} parent=1 // loop_exit
      _
    %916 = vsyncpa [#allocation3], 1
    %s917 = scalar_lea.sflag [#allocation3], 1
    %918 = vsyncpa %s917, 1
    %919 = vsyncpa [#allocation6], 1
    %920 = vsyncpa [#allocation4], 1
    %s921 = scalar_lea.sflag [#allocation4], 1
    %922 = vsyncpa %s921, 1

// kernel: tpu_custom_call.1
$region0: #{tpu_custom_call.1}
  #allocation0 [shape = 'u32[]', space=smem, size = 0x4, offset = 0x4, fixed_abs, tag = 'smem constant byte address 0x4 - core index']
  #allocation1 [shape = 'u32[144,128]{1,0:T(1,128)}', space=vmem, size = 0x12000, scoped, tag = 'internal scratch']
  %s0 = inlined_call_operand.hbm [shape: f32[144,512], index: 0, kind: input, shape index: {}]
  %s1 = inlined_call_operand.hbm [shape: bf16[512,128], index: 1, kind: input, shape index: {}]
  %s2 = inlined_call_operand.vmem [shape: f32[3,128], index: 2, kind: input, shape index: {}]
  %s3 = inlined_call_operand.hbm [shape: f32[144,128], index: 3, kind: input, shape index: {}]
  %s4 = inlined_call_operand.hbm [shape: f32[144,128], index: 4, kind: output, shape index: {}]
  %s5 = sld [smem:[#allocation0]]
  $region61: #{tpu_custom_call.1} parent=0
    _
  %s7 = ssub.s32 1, %s5
  %s8 = scalar_select 0, %s7, %s5
  $region1: #{tpu_custom_call.1} parent=0
    #allocation2 [shape = 'u8[262144]{0}', space=vmem, size = 0x40000, scoped, tag = 'input window, operand 0']
    #allocation3 [shape = 's32[2]{0}', space=sflag, size = 0x8, scoped, tag = 'scoped memory for tpu_custom_call.1']
    #allocation4 [shape = 's32[2]{0}', space=sflag, size = 0x8, scoped, tag = 'scoped memory for tpu_custom_call.1']
    #allocation5 [shape = 'u8[131072]{0}', space=vmem, size = 0x20000, scoped, tag = 'input window, operand 1, single buffered']
    #allocation6 [shape = 's32[1]{0}', space=sflag, size = 0x4, scoped, tag = 'scoped memory for tpu_custom_call.1']
    #allocation7 [shape = 'u8[65536]{0}', space=vmem, size = 0x10000, scoped, tag = 'input window, operand 3']
    #allocation8 [shape = 'u8[65536]{0}', space=vmem, size = 0x10000, scoped, tag = 'output window, operand 0']
    %9 = vsyncpa [#allocation3], 0
    %s10 = scalar_lea.sflag [#allocation3], 1
    %11 = vsyncpa %s10, 0
    %12 = vsyncpa [#allocation6], 0
    %13 = vsyncpa [#allocation4], 0
    %s14 = scalar_lea.sflag [#allocation4], 1
    %15 = vsyncpa %s14, 0
    loop: start=0, step=1, limit=5
    $region2: #{tpu_custom_call.1} parent=1 // loop_pre_header
      _
    $region3: #{tpu_custom_call.1} parent=1 // loop_header
      %s17 = sphi 0, %s21
      %p18 = scmp.ge.s32.totalorder %s17, 5
      %s27 = sphi 0, %s29
      %s30 = sphi 0, %s27
      %s31 = sphi 0, %s30
      %s47 = sphi 0, %s31
      %s51 = sphi 0, %s51
      %s53 = sphi 0, %s51
      %s54 = sphi 0, %s53
      %s68 = sphi 0, %s54
      %s72 = sphi 0, %s72
      %s74 = sphi 0, %s72
      %s75 = sphi 0, %s74
      %s89 = sphi 0, %s75
      %s95 = sphi 0, %s97
      %s98 = sphi 0, %s95
      %s99 = sphi 0, %s98
      %s115 = sphi 0, %s99
      %s121 = sphi 0, %s123
      %s124 = sphi 0, %s121
      %s125 = sphi 0, %s124
      %s141 = sphi 0, %s125
    $region4: #{tpu_custom_call.1} parent=1 // loop_header_branch
      %20 = sbr.rel (%p18) target = $region8
    $region5: #{tpu_custom_call.1} parent=1 // loop_body
      %s22 = ssub.s32 %s17, 1
      %s23 = ssub.s32 %s17, 2
      %s24 = sadd.s32 %s17, 1
      %s25 = ssub.s32 %s17, %s24
      %p26 = scmp.eq.s32.totalorder %s25, 0
      %s28 = sadd.s32 %s27, 1
      %s29 = scalar_select %p26, %s27, %s28
      %p32 = pneg %p26
      %p33 = scmp.eq.s32.totalorder %s17, 2
      %p34 = por %p32, %p33
      %p35 = scmp.ne.s32.totalorder %s27, %s30
      %p36 = scmp.eq.s32.totalorder %s17, 0
      %p37 = por %p35, %p36
      %p38 = scmp.ne.s32.totalorder %s27, %s30
      %p39 = scmp.eq.s32.totalorder %s22, 2
      %p40 = por %p38, %p39
      %p41 = scmp.ne.s32.totalorder %s30, %s31
      %p42 = scmp.eq.s32.totalorder %s22, 0
      %p43 = por %p41, %p42
      %p44 = scmp.ne.s32.totalorder %s30, %s31
      %p45 = scmp.eq.s32.totalorder %s23, 2
      %p46 = por %p44, %p45
      %p48 = scmp.ne.s32.totalorder %s31, %s47
      %p49 = scmp.eq.s32.totalorder %s23, 0
      %p50 = por %p48, %p49
      %s52 = sadd.s32 %s51, 1
      %p55 = scmp.eq.s32.totalorder %s17, 2
      %p56 = scmp.ne.s32.totalorder %s51, %s53
      %p57 = scmp.eq.s32.totalorder %s17, 0
      %p58 = por %p56, %p57
      %p59 = scmp.ne.s32.totalorder %s51, %s53
      %p60 = scmp.eq.s32.totalorder %s22, 2
      %p61 = por %p59, %p60
      %p62 = scmp.ne.s32.totalorder %s53, %s54
      %p63 = scmp.eq.s32.totalorder %s22, 0
      %p64 = por %p62, %p63
      %p65 = scmp.ne.s32.totalorder %s53, %s54
      %p66 = scmp.eq.s32.totalorder %s23, 2
      %p67 = por %p65, %p66
      %p69 = scmp.ne.s32.totalorder %s54, %s68
      %p70 = scmp.eq.s32.totalorder %s23, 0
      %p71 = por %p69, %p70
      %s73 = sadd.s32 %s72, 1
      %p76 = scmp.eq.s32.totalorder %s17, 2
      %p77 = scmp.ne.s32.totalorder %s72, %s74
      %p78 = scmp.eq.s32.totalorder %s17, 0
      %p79 = por %p77, %p78
      %p80 = scmp.ne.s32.totalorder %s72, %s74
      %p81 = scmp.eq.s32.totalorder %s22, 2
      %p82 = por %p80, %p81
      %p83 = scmp.ne.s32.totalorder %s74, %s75
      %p84 = scmp.eq.s32.totalorder %s22, 0
      %p85 = por %p83, %p84
      %p86 = scmp.ne.s32.totalorder %s74, %s75
      %p87 = scmp.eq.s32.totalorder %s23, 2
      %p88 = por %p86, %p87
      %p90 = scmp.ne.s32.totalorder %s75, %s89
      %p91 = scmp.eq.s32.totalorder %s23, 0
      %p92 = por %p90, %p91
      %s93 = ssub.s32 %s17, %s24
      %p94 = scmp.eq.s32.totalorder %s93, 0
      %s96 = sadd.s32 %s95, 1
      %s97 = scalar_select %p94, %s95, %s96
      %p100 = pneg %p94
      %p101 = scmp.eq.s32.totalorder %s17, 2
      %p102 = por %p100, %p101
      %p103 = scmp.ne.s32.totalorder %s95, %s98
      %p104 = scmp.eq.s32.totalorder %s17, 0
      %p105 = por %p103, %p104
      %p106 = scmp.ne.s32.totalorder %s95, %s98
      %p107 = scmp.eq.s32.totalorder %s22, 2
      %p108 = por %p106, %p107
      %p109 = scmp.ne.s32.totalorder %s98, %s99
      %p110 = scmp.eq.s32.totalorder %s22, 0
      %p111 = por %p109, %p110
      %p112 = scmp.ne.s32.totalorder %s98, %s99
      %p113 = scmp.eq.s32.totalorder %s23, 2
      %p114 = por %p112, %p113
      %p116 = scmp.ne.s32.totalorder %s99, %s115
      %p117 = scmp.eq.s32.totalorder %s23, 0
      %p118 = por %p116, %p117
      %s119 = ssub.s32 %s17, %s24
      %p120 = scmp.eq.s32.totalorder %s119, 0
      %s122 = sadd.s32 %s121, 1
      %s123 = scalar_select %p120, %s121, %s122
      %p126 = pneg %p120
      %p127 = scmp.eq.s32.totalorder %s17, 2
      %p128 = por %p126, %p127
      %p129 = scmp.ne.s32.totalorder %s121, %s124
      %p130 = scmp.eq.s32.totalorder %s17, 0
      %p131 = por %p129, %p130
      %p132 = scmp.ne.s32.totalorder %s121, %s124
      %p133 = scmp.eq.s32.totalorder %s22, 2
      %p134 = por %p132, %p133
      %p135 = scmp.ne.s32.totalorder %s124, %s125
      %p136 = scmp.eq.s32.totalorder %s22, 0
      %p137 = por %p135, %p136
      %p138 = scmp.ne.s32.totalorder %s124, %s125
      %p139 = scmp.eq.s32.totalorder %s23, 2
      %p140 = por %p138, %p139
      %p142 = scmp.ne.s32.totalorder %s125, %s141
      %p143 = scmp.eq.s32.totalorder %s23, 0
      %p144 = por %p142, %p143
      %p145 = scmp.le.s32.totalorder 1, %s17
      %p146 = scmp.lt.s32.totalorder %s17, 4
      %p147 = pnand %p145, %p146
      %p148 = pneg %p147
      // Predicated region
      $region9: #{tpu_custom_call.1} parent=5 // pred_check
        _
      $region10: #{tpu_custom_call.1} parent=5 // pred_check_branch
        %150 = sbr.rel (%p147) target = $region12
      $region11: #{tpu_custom_call.1} parent=5 // pred_region
        %s151 = ssub.s32 %s17, 1
        // Predicated region
        $region13: #{tpu_custom_call.1} parent=11 // pred_check
          %p152 = pneg %p64
        $region14: #{tpu_custom_call.1} parent=11 // pred_check_branch
          %154 = sbr.rel (%p152) target = $region16
        $region15: #{tpu_custom_call.1} parent=11 // pred_region
          %s156 = ssub.s32 4096, 4096
          %157 = vsyncadd [#allocation6], %s156
          %s158 = sshll.u32 [#allocation5], 4
          %s159 = int_to_ptr.vmem [resolvable:$true] %s158
          %164 = dma.hbm_to_vmem [thread:$0]  %s1, 4096, %s159, [#allocation6], 64, 64, 4
        $region16: #{tpu_custom_call.1} parent=11 // pred_fallthru
          _
        // Predicated region
        $region17: #{tpu_custom_call.1} parent=11 // pred_check
          %p165 = pneg %p85
        $region18: #{tpu_custom_call.1} parent=11 // pred_check_branch
          %167 = sbr.rel (%p165) target = $region20
        $region19: #{tpu_custom_call.1} parent=11 // pred_region
          _
        $region20: #{tpu_custom_call.1} parent=11 // pred_fallthru
          _
      $region12: #{tpu_custom_call.1} parent=5 // pred_fallthru
        _
      %p168 = scmp.lt.s32.totalorder %s17, 3
      // Predicated region
      $region21: #{tpu_custom_call.1} parent=5 // pred_check
        %p169 = pneg %p168
      $region22: #{tpu_custom_call.1} parent=5 // pred_check_branch
        %171 = sbr.rel (%p169) target = $region24
      $region23: #{tpu_custom_call.1} parent=5 // pred_region
        // Predicated region
        $region25: #{tpu_custom_call.1} parent=23 // pred_check
          %p172 = pneg %p37
        $region26: #{tpu_custom_call.1} parent=23 // pred_check_branch
          %174 = sbr.rel (%p172) target = $region28
        $region27: #{tpu_custom_call.1} parent=23 // pred_region
          %s175 = sand.u32 %s17, 1
          %s176 = scalar_lea.sflag [#allocation3], %s175
          %s177 = sand.u32 %s27, 1
          %s178 = smul.addr %s177, 256
          %s179 = scalar_lea.vmem [#allocation2], %s178
          %s180 = smul.u32 8, %s17
          %s181 = ssub.s32 18, %s180
          %p182 = scmp.lt.s32.totalorder %s181, 8
          %s183 = scalar_select %p182, %s181, 8
          %s184 = smul.u32 128, %s183
          %s185 = smul.u32 %s184, 4
          %s187 = ssub.s32 4096, %s185
          %188 = vsyncadd %s176, %s187
          %p189 = scmp.ne.s32.totalorder 0, %s185
          %s190 = smul.addr %s180, 4
          %s191 = smul.addr %s190, 128
          %s192 = scalar_lea.hbm %s0, %s191
          %s193 = smul.u32 32, %s183
          %s194 = sshll.u32 %s179, 4
          %s195 = int_to_ptr.vmem [resolvable:$true] %s194
          %s196 = sshll.u32 %s193, 4
          %200 = dma.hbm_to_vmem [thread:$0]  (%p189), %s192, %s196, %s195, %s176, 512, 512, 32
        $region28: #{tpu_custom_call.1} parent=23 // pred_fallthru
          _
        // Predicated region
        $region29: #{tpu_custom_call.1} parent=23 // pred_check
          %p201 = pneg %p105
        $region30: #{tpu_custom_call.1} parent=23 // pred_check_branch
          %203 = sbr.rel (%p201) target = $region32
        $region31: #{tpu_custom_call.1} parent=23 // pred_region
          %s204 = sand.u32 %s17, 1
          %s205 = scalar_lea.sflag [#allocation3], %s204
          %s206 = sand.u32 %s95, 1
          %s207 = smul.addr %s206, 64
          %s208 = scalar_lea.vmem [#allocation7], %s207
          %s209 = smul.u32 8, %s17
          %s210 = ssub.s32 18, %s209
          %p211 = scmp.lt.s32.totalorder %s210, 8
          %s212 = scalar_select %p211, %s210, 8
          %s213 = smul.u32 128, %s212
          %s215 = ssub.s32 1024, %s213
          %216 = vsyncadd %s205, %s215
          %p217 = scmp.ne.s32.totalorder 0, %s213
          %s218 = smul.addr %s209, 128
          %s219 = scalar_lea.hbm %s3, %s218
          %s220 = smul.u32 8, %s212
          %s221 = sshll.u32 %s208, 4
          %s222 = int_to_ptr.vmem [resolvable:$true] %s221
          %s223 = sshll.u32 %s220, 4
          %227 = dma.hbm_to_vmem [thread:$0]  (%p217), %s219, %s223, %s222, %s205, 128, 128, 8
        $region32: #{tpu_custom_call.1} parent=23 // pred_fallthru
          _
      $region24: #{tpu_custom_call.1} parent=5 // pred_fallthru
        _
      %p228 = scmp.le.s32.totalorder 1, %s17
      %p229 = scmp.lt.s32.totalorder %s17, 4
      %p230 = pnand %p228, %p229
      %p231 = pneg %p230
      // Predicated region
      $region33: #{tpu_custom_call.1} parent=5 // pred_check
        _
      $region34: #{tpu_custom_call.1} parent=5 // pred_check_branch
        %233 = sbr.rel (%p230) target = $region36
      $region35: #{tpu_custom_call.1} parent=5 // pred_region
        %s234 = ssub.s32 %s17, 1
        %s235 = sand.u32 %s22, 1
        %s236 = scalar_lea.sflag [#allocation3], %s235
        %s237 = sand.u32 %s30, 1
        %s238 = smul.addr %s237, 256
        %s239 = scalar_lea.vmem [#allocation2], %s238
        // Predicated region
        $region37: #{tpu_custom_call.1} parent=35 // pred_check
          %p240 = pneg %p43
        $region38: #{tpu_custom_call.1} parent=35 // pred_check_branch
          %242 = sbr.rel (%p240) target = $region40
        $region39: #{tpu_custom_call.1} parent=35 // pred_region
          %243 = dma.done %s236, 4096
        $region40: #{tpu_custom_call.1} parent=35 // pred_fallthru
          _
        // Predicated region
        $region41: #{tpu_custom_call.1} parent=35 // pred_check
          %p244 = pneg %p64
        $region42: #{tpu_custom_call.1} parent=35 // pred_check_branch
          %246 = sbr.rel (%p244) target = $region44
        $region43: #{tpu_custom_call.1} parent=35 // pred_region
          %247 = dma.done [#allocation6], 4096
        $region44: #{tpu_custom_call.1} parent=35 // pred_fallthru
          _
        %s248 = sand.u32 %s22, 1
        %s249 = scalar_lea.sflag [#allocation3], %s248
        %s250 = sand.u32 %s98, 1
        %s251 = smul.addr %s250, 64
        %s252 = scalar_lea.vmem [#allocation7], %s251
        // Predicated region
        $region45: #{tpu_custom_call.1} parent=35 // pred_check
          %p253 = pneg %p111
        $region46: #{tpu_custom_call.1} parent=35 // pred_check_branch
          %255 = sbr.rel (%p253) target = $region48
        $region47: #{tpu_custom_call.1} parent=35 // pred_region
          %256 = dma.done %s249, 1024
        $region48: #{tpu_custom_call.1} parent=35 // pred_fallthru
          _
        %s257 = sand.u32 %s22, 1
        %s258 = scalar_lea.sflag [#allocation3], %s257
        %s259 = sand.u32 %s30, 1
        %s260 = smul.addr %s259, 256
        %s261 = scalar_lea.vmem [#allocation2], %s260
        %p262 = pneg %p43
        %p263 = pneg %p40
        %p264 = pneg %p64
        %p265 = pneg %p61
        %p266 = pneg %p85
        %p267 = pneg %p82
        %s268 = sand.u32 %s22, 1
        %s269 = scalar_lea.sflag [#allocation3], %s268
        %s270 = sand.u32 %s98, 1
        %s271 = smul.addr %s270, 64
        %s272 = scalar_lea.vmem [#allocation7], %s271
        %p273 = pneg %p111
        %p274 = pneg %p108
        %p275 = pneg %p137
        %p276 = pneg %p134
        %s277 = sand.u32 %s124, 1
        %s278 = scalar_lea.sflag [#allocation4], %s277
        %s279 = sand.u32 %s124, 1
        %s280 = smul.addr %s279, 64
        %s281 = scalar_lea.vmem [#allocation8], %s280
        %s282 = smul.u32 8, %s22
        %s283 = ssub.s32 18, %s282
        %p284 = scmp.lt.s32.totalorder %s283, 8
        %s285 = scalar_select %p284, %s283, 8
        %s286 = smul.u32 128, %s285
        %s287 = smul.u32 %s286, 4
        %s288 = smul.u32 8, %s22
        %s289 = ssub.s32 18, %s288
        %p290 = scmp.lt.s32.totalorder %s289, 8
        %s291 = scalar_select %p290, %s289, 8
        %s292 = smul.u32 128, %s291
        %s293 = smul.u32 8, %s22
        %s294 = ssub.s32 18, %s293
        %p295 = scmp.lt.s32.totalorder %s294, 8
        %s296 = scalar_select %p295, %s294, 8
        %s297 = smul.u32 128, %s296
        %v299 = vld [vmem:[%s2] sm:$0x7]
        %v300 = vld [vmem:[%s239] sm:$0xff]
        %v301 = vld [vmem:[%s239 + $0x8] sm:$0xff]
        %v302 = vld [vmem:[%s239 + $0x10] sm:$0xff]
        %v303 = vld [vmem:[%s239 + $0x18] sm:$0xff]
        %v304 = vld [vmem:[%s239 + $0x20] sm:$0xff]
        %v305 = vld [vmem:[%s239 + $0x28] sm:$0xff]
        %v306 = vld [vmem:[%s239 + $0x30] sm:$0xff]
        %v307 = vld [vmem:[%s239 + $0x38] sm:$0xff]
        %v308 = vld [vmem:[%s239 + $0x40] sm:$0xff]
        %v309 = vld [vmem:[%s239 + $0x48] sm:$0xff]
        %v310 = vld [vmem:[%s239 + $0x50] sm:$0xff]
        %v311 = vld [vmem:[%s239 + $0x58] sm:$0xff]
        %v312 = vld [vmem:[%s239 + $0x60] sm:$0xff]
        %v313 = vld [vmem:[%s239 + $0x68] sm:$0xff]
        %v314 = vld [vmem:[%s239 + $0x70] sm:$0xff]
        %v315 = vld [vmem:[%s239 + $0x78] sm:$0xff]
        %v316 = vld [vmem:[%s239 + $0x80] sm:$0xff]
        %v317 = vld [vmem:[%s239 + $0x88] sm:$0xff]
        %v318 = vld [vmem:[%s239 + $0x90] sm:$0xff]
        %v319 = vld [vmem:[%s239 + $0x98] sm:$0xff]
        %v320 = vld [vmem:[%s239 + $0xa0] sm:$0xff]
        %v321 = vld [vmem:[%s239 + $0xa8] sm:$0xff]
        %v322 = vld [vmem:[%s239 + $0xb0] sm:$0xff]
        %v323 = vld [vmem:[%s239 + $0xb8] sm:$0xff]
        %v324 = vld [vmem:[%s239 + $0xc0] sm:$0xff]
        %v325 = vld [vmem:[%s239 + $0xc8] sm:$0xff]
        %v326 = vld [vmem:[%s239 + $0xd0] sm:$0xff]
        %v327 = vld [vmem:[%s239 + $0xd8] sm:$0xff]
        %v328 = vld [vmem:[%s239 + $0xe0] sm:$0xff]
        %v329 = vld [vmem:[%s239 + $0xe8] sm:$0xff]
        %v330 = vld [vmem:[%s239 + $0xf0] sm:$0xff]
        %v331 = vld [vmem:[%s239 + $0xf8] sm:$0xff]
        %v332 = vpack.c.bf16 %v304, %v300
        %v333 = vpack.c.bf16 %v305, %v301
        %v334 = vpack.c.bf16 %v306, %v302
        %v335 = vpack.c.bf16 %v307, %v303
        %v336 = vpack.c.bf16 %v312, %v308
        %v337 = vpack.c.bf16 %v313, %v309
        %v338 = vpack.c.bf16 %v314, %v310
        %v339 = vpack.c.bf16 %v315, %v311
        %v340 = vpack.c.bf16 %v320, %v316
        %v341 = vpack.c.bf16 %v321, %v317
        %v342 = vpack.c.bf16 %v322, %v318
        %v343 = vpack.c.bf16 %v323, %v319
        %v344 = vpack.c.bf16 %v328, %v324
        %v345 = vpack.c.bf16 %v329, %v325
        %v346 = vpack.c.bf16 %v330, %v326
        %v347 = vpack.c.bf16 %v331, %v327
        %v348 = vld [vmem:[#allocation5] sm:$0xf]
        %v349 = vld [vmem:[#allocation5 + $0x4] sm:$0xf]
        %v350 = vld [vmem:[#allocation5 + $0x8] sm:$0xf]
        %v351 = vld [vmem:[#allocation5 + $0xc] sm:$0xf]
        %v352 = vld [vmem:[#allocation5 + $0x10] sm:$0xf]
        %v353 = vld [vmem:[#allocation5 + $0x14] sm:$0xf]
        %v354 = vld [vmem:[#allocation5 + $0x18] sm:$0xf]
        %v355 = vld [vmem:[#allocation5 + $0x1c] sm:$0xf]
        %v356 = vld [vmem:[#allocation5 + $0x20] sm:$0xf]
        %v357 = vld [vmem:[#allocation5 + $0x24] sm:$0xf]
        %v358 = vld [vmem:[#allocation5 + $0x28] sm:$0xf]
        %v359 = vld [vmem:[#allocation5 + $0x2c] sm:$0xf]
        %v360 = vld [vmem:[#allocation5 + $0x30] sm:$0xf]
        %v361 = vld [vmem:[#allocation5 + $0x34] sm:$0xf]
        %v362 = vld [vmem:[#allocation5 + $0x38] sm:$0xf]
        %v363 = vld [vmem:[#allocation5 + $0x3c] sm:$0xf]
        %v364 = vld [vmem:[#allocation5 + $0x40] sm:$0xf]
        %v365 = vld [vmem:[#allocation5 + $0x44] sm:$0xf]
        %v366 = vld [vmem:[#allocation5 + $0x48] sm:$0xf]
        %v367 = vld [vmem:[#allocation5 + $0x4c] sm:$0xf]
        %v368 = vld [vmem:[#allocation5 + $0x50] sm:$0xf]
        %v369 = vld [vmem:[#allocation5 + $0x54] sm:$0xf]
        %v370 = vld [vmem:[#allocation5 + $0x58] sm:$0xf]
        %v371 = vld [vmem:[#allocation5 + $0x5c] sm:$0xf]
        %v372 = vld [vmem:[#allocation5 + $0x60] sm:$0xf]
        %v373 = vld [vmem:[#allocation5 + $0x64] sm:$0xf]
        %v374 = vld [vmem:[#allocation5 + $0x68] sm:$0xf]
        %v375 = vld [vmem:[#allocation5 + $0x6c] sm:$0xf]
        %v376 = vld [vmem:[#allocation5 + $0x70] sm:$0xf]
        %v377 = vld [vmem:[#allocation5 + $0x74] sm:$0xf]
        %v378 = vld [vmem:[#allocation5 + $0x78] sm:$0xf]
        %v379 = vld [vmem:[#allocation5 + $0x7c] sm:$0xf]
        %v380 = vld [vmem:[#allocation5 + $0x80] sm:$0xf]
        %v381 = vld [vmem:[#allocation5 + $0x84] sm:$0xf]
        %v382 = vld [vmem:[#allocation5 + $0x88] sm:$0xf]
        %v383 = vld [vmem:[#allocation5 + $0x8c] sm:$0xf]
        %v384 = vld [vmem:[#allocation5 + $0x90] sm:$0xf]
        %v385 = vld [vmem:[#allocation5 + $0x94] sm:$0xf]
        %v386 = vld [vmem:[#allocation5 + $0x98] sm:$0xf]
        %v387 = vld [vmem:[#allocation5 + $0x9c] sm:$0xf]
        %v388 = vld [vmem:[#allocation5 + $0xa0] sm:$0xf]
        %v389 = vld [vmem:[#allocation5 + $0xa4] sm:$0xf]
        %v390 = vld [vmem:[#allocation5 + $0xa8] sm:$0xf]
        %v391 = vld [vmem:[#allocation5 + $0xac] sm:$0xf]
        %v392 = vld [vmem:[#allocation5 + $0xb0] sm:$0xf]
        %v393 = vld [vmem:[#allocation5 + $0xb4] sm:$0xf]
        %v394 = vld [vmem:[#allocation5 + $0xb8] sm:$0xf]
        %v395 = vld [vmem:[#allocation5 + $0xbc] sm:$0xf]
        %v396 = vld [vmem:[#allocation5 + $0xc0] sm:$0xf]
        %v397 = vld [vmem:[#allocation5 + $0xc4] sm:$0xf]
        %v398 = vld [vmem:[#allocation5 + $0xc8] sm:$0xf]
        %v399 = vld [vmem:[#allocation5 + $0xcc] sm:$0xf]
        %v400 = vld [vmem:[#allocation5 + $0xd0] sm:$0xf]
        %v401 = vld [vmem:[#allocation5 + $0xd4] sm:$0xf]
        %v402 = vld [vmem:[#allocation5 + $0xd8] sm:$0xf]
        %v403 = vld [vmem:[#allocation5 + $0xdc] sm:$0xf]
        %v404 = vld [vmem:[#allocation5 + $0xe0] sm:$0xf]
        %v405 = vld [vmem:[#allocation5 + $0xe4] sm:$0xf]
        %v406 = vld [vmem:[#allocation5 + $0xe8] sm:$0xf]
        %v407 = vld [vmem:[#allocation5 + $0xec] sm:$0xf]
        %v408 = vld [vmem:[#allocation5 + $0xf0] sm:$0xf]
        %v409 = vld [vmem:[#allocation5 + $0xf4] sm:$0xf]
        %v410 = vld [vmem:[#allocation5 + $0xf8] sm:$0xf]
        %v411 = vld [vmem:[#allocation5 + $0xfc] sm:$0xf]
        %v412 = vlaneseq
        %v413 = vshrl.u32 %v412, 7
        %v414 = vsub.s32 0, %v413
        %v415 = vrot.slane %v299, %v414
        %v480 = vunpack.c.l.b16 %v348
        %v481 = vunpack.c.l.b16 %v349
        %v482 = vunpack.c.l.b16 %v350
        %v483 = vunpack.c.l.b16 %v351
        %v484 = vunpack.c.l.b16 %v352
        %v485 = vunpack.c.l.b16 %v353
        %v486 = vunpack.c.l.b16 %v354
        %v487 = vunpack.c.l.b16 %v355
        %v488 = vunpack.c.l.b16 %v356
        %v489 = vunpack.c.l.b16 %v357
        %v490 = vunpack.c.l.b16 %v358
        %v491 = vunpack.c.l.b16 %v359
        %v492 = vunpack.c.l.b16 %v360
        %v493 = vunpack.c.l.b16 %v361
        %v494 = vunpack.c.l.b16 %v362
        %v495 = vunpack.c.l.b16 %v363
        %v496 = vunpack.c.l.b16 %v364
        %v497 = vunpack.c.l.b16 %v365
        %v498 = vunpack.c.l.b16 %v366
        %v499 = vunpack.c.l.b16 %v367
        %v500 = vunpack.c.l.b16 %v368
        %v501 = vunpack.c.l.b16 %v369
        %v502 = vunpack.c.l.b16 %v370
        %v503 = vunpack.c.l.b16 %v371
        %v504 = vunpack.c.l.b16 %v372
        %v505 = vunpack.c.l.b16 %v373
        %v506 = vunpack.c.l.b16 %v374
        %v507 = vunpack.c.l.b16 %v375
        %v508 = vunpack.c.l.b16 %v376
        %v509 = vunpack.c.l.b16 %v377
        %v510 = vunpack.c.l.b16 %v378
        %v511 = vunpack.c.l.b16 %v379
        %v512 = vunpack.c.l.b16 %v380
        %v513 = vunpack.c.l.b16 %v381
        %v514 = vunpack.c.l.b16 %v382
        %v515 = vunpack.c.l.b16 %v383
        %v516 = vunpack.c.l.b16 %v384
        %v517 = vunpack.c.l.b16 %v385
        %v518 = vunpack.c.l.b16 %v386
        %v519 = vunpack.c.l.b16 %v387
        %v520 = vunpack.c.l.b16 %v388
        %v521 = vunpack.c.l.b16 %v389
        %v522 = vunpack.c.l.b16 %v390
        %v523 = vunpack.c.l.b16 %v391
        %v524 = vunpack.c.l.b16 %v392
        %v525 = vunpack.c.l.b16 %v393
        %v526 = vunpack.c.l.b16 %v394
        %v527 = vunpack.c.l.b16 %v395
        %v528 = vunpack.c.l.b16 %v396
        %v529 = vunpack.c.l.b16 %v397
        %v530 = vunpack.c.l.b16 %v398
        %v531 = vunpack.c.l.b16 %v399
        %v532 = vunpack.c.l.b16 %v400
        %v533 = vunpack.c.l.b16 %v401
        %v534 = vunpack.c.l.b16 %v402
        %v535 = vunpack.c.l.b16 %v403
        %v536 = vunpack.c.l.b16 %v404
        %v537 = vunpack.c.l.b16 %v405
        %v538 = vunpack.c.l.b16 %v406
        %v539 = vunpack.c.l.b16 %v407
        %v540 = vunpack.c.l.b16 %v408
        %v541 = vunpack.c.l.b16 %v409
        %v542 = vunpack.c.l.b16 %v410
        %v543 = vunpack.c.l.b16 %v411
        %v544 = vpack.c.b16 %v481, %v480
        %v545 = vpack.c.b16 %v483, %v482
        %v546 = vpack.c.b16 %v485, %v484
        %v547 = vpack.c.b16 %v487, %v486
        %v548 = vpack.c.b16 %v489, %v488
        %v549 = vpack.c.b16 %v491, %v490
        %v550 = vpack.c.b16 %v493, %v492
        %v551 = vpack.c.b16 %v495, %v494
        %v552 = vpack.c.b16 %v497, %v496
        %v553 = vpack.c.b16 %v499, %v498
        %v554 = vpack.c.b16 %v501, %v500
        %v555 = vpack.c.b16 %v503, %v502
        %v556 = vpack.c.b16 %v505, %v504
        %v557 = vpack.c.b16 %v507, %v506
        %v558 = vpack.c.b16 %v509, %v508
        %v559 = vpack.c.b16 %v511, %v510
        %v560 = vpack.c.b16 %v513, %v512
        %v561 = vpack.c.b16 %v515, %v514
        %v562 = vpack.c.b16 %v517, %v516
        %v563 = vpack.c.b16 %v519, %v518
        %v564 = vpack.c.b16 %v521, %v520
        %v565 = vpack.c.b16 %v523, %v522
        %v566 = vpack.c.b16 %v525, %v524
        %v567 = vpack.c.b16 %v527, %v526
        %v568 = vpack.c.b16 %v529, %v528
        %v569 = vpack.c.b16 %v531, %v530
        %v570 = vpack.c.b16 %v533, %v532
        %v571 = vpack.c.b16 %v535, %v534
        %v572 = vpack.c.b16 %v537, %v536
        %v573 = vpack.c.b16 %v539, %v538
        %v574 = vpack.c.b16 %v541, %v540
        %v575 = vpack.c.b16 %v543, %v542
        %608 = vmatprep.subr.bf16.mxu0 0
        %609 = vmatpush1.bf16.msra.mxu0 %v544
        %610 = vmatprep.subr.bf16.mxu0 0
        %611 = vmatpush1.bf16.msra.mxu0 %v545
        %612 = vmatprep.subr.bf16.mxu0 0
        %613 = vmatpush1.bf16.msra.mxu0 %v546
        %614 = vmatprep.subr.bf16.mxu0 0
        %615 = vmatpush1.bf16.msra.mxu0 %v547
        %616 = vmatprep.subr.bf16.mxu0 0
        %617 = vmatpush1.bf16.msra.mxu0 %v548
        %618 = vmatprep.subr.bf16.mxu0 0
        %619 = vmatpush1.bf16.msra.mxu0 %v549
        %620 = vmatprep.subr.bf16.mxu0 0
        %621 = vmatpush1.bf16.msra.mxu0 %v550
        %622 = vmatprep.subr.bf16.mxu0 0
        %623 = vmatpush1.bf16.msra.mxu0 %v551
        %624 = vmatprep.subr.bf16.mxu0 0
        %625 = vmatpush1.bf16.msra.mxu0 %v552
        %626 = vmatprep.subr.bf16.mxu0 0
        %627 = vmatpush1.bf16.msra.mxu0 %v553
        %628 = vmatprep.subr.bf16.mxu0 0
        %629 = vmatpush1.bf16.msra.mxu0 %v554
        %630 = vmatprep.subr.bf16.mxu0 0
        %631 = vmatpush1.bf16.msra.mxu0 %v555
        %632 = vmatprep.subr.bf16.mxu0 0
        %633 = vmatpush1.bf16.msra.mxu0 %v556
        %634 = vmatprep.subr.bf16.mxu0 0
        %635 = vmatpush1.bf16.msra.mxu0 %v557
        %636 = vmatprep.subr.bf16.mxu0 0
        %637 = vmatpush1.bf16.msra.mxu0 %v558
        %638 = vmatprep.subr.bf16.mxu0 0
        %639 = vmatpush1.bf16.msra.mxu0 %v559
        %640 = vmatprep.mubr.bf16.mxu0 %v333
        %641 = vmatmul.mubr.bf16.gmra.mrb[0].mxu0 %v332
        %v642 = vpop.f32.mrb[0].mxu0
        %v643 = vadd.f32 %v415, %v642
        %v644 = vpop.f32.mrb[0].mxu0
        %v645 = vpop.f32.mrb[0].mxu0
        %v646 = vadd.f32 %v415, %v645
        %v647 = vpop.f32.mrb[0].mxu0
        %648 = vmatprep.mubr.bf16.mxu0 %v337
        %649 = vmatmul.mubr.bf16.gmra.mrb[0].mxu0 %v336
        %v650 = vpop.f32.mrb[0].mxu0
        %v651 = vadd.f32 %v415, %v650
        %v652 = vpop.f32.mrb[0].mxu0
        %v653 = vpop.f32.mrb[0].mxu0
        %v654 = vadd.f32 %v415, %v653
        %v655 = vpop.f32.mrb[0].mxu0
        %656 = vmatprep.mubr.bf16.mxu0 %v341
        %657 = vmatmul.mubr.bf16.gmra.mrb[0].mxu0 %v340
        %v658 = vpop.f32.mrb[0].mxu0
        %v659 = vadd.f32 %v415, %v658
        %v660 = vpop.f32.mrb[0].mxu0
        %v661 = vpop.f32.mrb[0].mxu0
        %v662 = vadd.f32 %v415, %v661
        %v663 = vpop.f32.mrb[0].mxu0
        %664 = vmatprep.mubr.bf16.mxu0 %v345
        %665 = vmatmul.mubr.bf16.gmra.mrb[0].mxu0 %v344
        %v666 = vpop.f32.mrb[0].mxu0
        %v667 = vadd.f32 %v415, %v666
        %v668 = vpop.f32.mrb[0].mxu0
        %v669 = vpop.f32.mrb[0].mxu0
        %v670 = vadd.f32 %v415, %v669
        %v671 = vpop.f32.mrb[0].mxu0
        %672 = vdwg.mxu0
        %673 = vmatprep.subr.bf16.mxu0 0
        %674 = vmatpush1.bf16.msra.mxu0 %v560
        %675 = vmatprep.subr.bf16.mxu0 0
        %676 = vmatpush1.bf16.msra.mxu0 %v561
        %677 = vmatprep.subr.bf16.mxu0 0
        %678 = vmatpush1.bf16.msra.mxu0 %v562
        %679 = vmatprep.subr.bf16.mxu0 0
        %680 = vmatpush1.bf16.msra.mxu0 %v563
        %681 = vmatprep.subr.bf16.mxu0 0
        %682 = vmatpush1.bf16.msra.mxu0 %v564
        %683 = vmatprep.subr.bf16.mxu0 0
        %684 = vmatpush1.bf16.msra.mxu0 %v565
        %685 = vmatprep.subr.bf16.mxu0 0
        %686 = vmatpush1.bf16.msra.mxu0 %v566
        %687 = vmatprep.subr.bf16.mxu0 0
        %688 = vmatpush1.bf16.msra.mxu0 %v567
        %689 = vmatprep.subr.bf16.mxu0 0
        %690 = vmatpush1.bf16.msra.mxu0 %v568
        %691 = vmatprep.subr.bf16.mxu0 0
        %692 = vmatpush1.bf16.msra.mxu0 %v569
        %693 = vmatprep.subr.bf16.mxu0 0
        %694 = vmatpush1.bf16.msra.mxu0 %v570
        %695 = vmatprep.subr.bf16.mxu0 0
        %696 = vmatpush1.bf16.msra.mxu0 %v571
        %697 = vmatprep.subr.bf16.mxu0 0
        %698 = vmatpush1.bf16.msra.mxu0 %v572
        %699 = vmatprep.subr.bf16.mxu0 0
        %700 = vmatpush1.bf16.msra.mxu0 %v573
        %701 = vmatprep.subr.bf16.mxu0 0
        %702 = vmatpush1.bf16.msra.mxu0 %v574
        %703 = vmatprep.subr.bf16.mxu0 0
        %704 = vmatpush1.bf16.msra.mxu0 %v575
        %705 = vmatprep.mubr.bf16.mxu0 %v335
        %706 = vmatmul.mubr.bf16.gmra.mrb[0].mxu0 %v334
        %v707 = vpop.f32.mrb[0].mxu0
        %v708 = vadd.f32 %v643, %v707
        %v709 = vpop.f32.mrb[0].mxu0
        %v710 = vpop.f32.mrb[0].mxu0
        %v711 = vadd.f32 %v646, %v710
        %v712 = vpop.f32.mrb[0].mxu0
        %713 = vmatprep.mubr.bf16.mxu0 %v339
        %714 = vmatmul.mubr.bf16.gmra.mrb[0].mxu0 %v338
        %v715 = vpop.f32.mrb[0].mxu0
        %v716 = vadd.f32 %v651, %v715
        %v717 = vpop.f32.mrb[0].mxu0
        %v718 = vpop.f32.mrb[0].mxu0
        %v719 = vadd.f32 %v654, %v718
        %v720 = vpop.f32.mrb[0].mxu0
        %721 = vmatprep.mubr.bf16.mxu0 %v343
        %722 = vmatmul.mubr.bf16.gmra.mrb[0].mxu0 %v342
        %v723 = vpop.f32.mrb[0].mxu0
        %v724 = vadd.f32 %v659, %v723
        %v725 = vpop.f32.mrb[0].mxu0
        %v726 = vpop.f32.mrb[0].mxu0
        %v727 = vadd.f32 %v662, %v726
        %v728 = vpop.f32.mrb[0].mxu0
        %729 = vmatprep.mubr.bf16.mxu0 %v347
        %730 = vmatmul.mubr.bf16.gmra.mrb[0].mxu0 %v346
        %v731 = vpop.f32.mrb[0].mxu0
        %v732 = vadd.f32 %v667, %v731
        %v733 = vpop.f32.mrb[0].mxu0
        %v734 = vpop.f32.mrb[0].mxu0
        %v735 = vadd.f32 %v670, %v734
        %v736 = vpop.f32.mrb[0].mxu0
        %737 = vdwg.mxu0
        %v738 = vld [vmem:[%s252] sm:$0xff]
        %v739 = vld [vmem:[%s252 + $0x8] sm:$0xff]
        %v740 = vld [vmem:[%s252 + $0x10] sm:$0xff]
        %v741 = vld [vmem:[%s252 + $0x18] sm:$0xff]
        %v742 = vld [vmem:[%s252 + $0x20] sm:$0xff]
        %v743 = vld [vmem:[%s252 + $0x28] sm:$0xff]
        %v744 = vld [vmem:[%s252 + $0x30] sm:$0xff]
        %v745 = vld [vmem:[%s252 + $0x38] sm:$0xff]
        %v746 = vadd.f32 %v708, %v738
        %v747 = vadd.f32 %v711, %v739
        %v748 = vadd.f32 %v716, %v740
        %v749 = vadd.f32 %v719, %v741
        %v750 = vadd.f32 %v724, %v742
        %v751 = vadd.f32 %v727, %v743
        %v752 = vadd.f32 %v732, %v744
        %v753 = vadd.f32 %v735, %v745
        %754 = vadd.xlane.f32.xlu0 %v746
        %v755 = vpop.xlane.xlu0 %754
        %756 = vadd.xlane.f32.xlu0 %v747
        %v757 = vpop.xlane.xlu0 %756
        %758 = vadd.xlane.f32.xlu0 %v748
        %v759 = vpop.xlane.xlu0 %758
        %760 = vadd.xlane.f32.xlu0 %v749
        %v761 = vpop.xlane.xlu0 %760
        %762 = vadd.xlane.f32.xlu0 %v750
        %v763 = vpop.xlane.xlu0 %762
        %764 = vadd.xlane.f32.xlu0 %v751
        %v765 = vpop.xlane.xlu0 %764
        %766 = vadd.xlane.f32.xlu0 %v752
        %v767 = vpop.xlane.xlu0 %766
        %768 = vadd.xlane.f32.xlu0 %v753
        %v769 = vpop.xlane.xlu0 %768
        %v770 = vrcp.pop 128.0
        %v771 = vmul.f32 %v755, %v770
        %v772 = vmul.f32 %v757, %v770
        %v773 = vmul.f32 %v759, %v770
        %v774 = vmul.f32 %v761, %v770
        %v775 = vmul.f32 %v763, %v770
        %v776 = vmul.f32 %v765, %v770
        %v777 = vmul.f32 %v767, %v770
        %v778 = vmul.f32 %v769, %v770
        %v779 = vsub.f32 %v746, %v771
        %v780 = vsub.f32 %v747, %v772
        %v781 = vsub.f32 %v748, %v773
        %v782 = vsub.f32 %v749, %v774
        %v783 = vsub.f32 %v750, %v775
        %v784 = vsub.f32 %v751, %v776
        %v785 = vsub.f32 %v752, %v777
        %v786 = vsub.f32 %v753, %v778
        %v787 = vmul.f32 %v779, %v779
        %v788 = vmul.f32 %v780, %v780
        %v789 = vmul.f32 %v781, %v781
        %v790 = vmul.f32 %v782, %v782
        %v791 = vmul.f32 %v783, %v783
        %v792 = vmul.f32 %v784, %v784
        %v793 = vmul.f32 %v785, %v785
        %v794 = vmul.f32 %v786, %v786
        %795 = vadd.xlane.f32.xlu0 %v787
        %v796 = vpop.xlane.xlu0 %795
        %797 = vadd.xlane.f32.xlu0 %v788
        %v798 = vpop.xlane.xlu0 %797
        %799 = vadd.xlane.f32.xlu0 %v789
        %v800 = vpop.xlane.xlu0 %799
        %801 = vadd.xlane.f32.xlu0 %v790
        %v802 = vpop.xlane.xlu0 %801
        %803 = vadd.xlane.f32.xlu0 %v791
        %v804 = vpop.xlane.xlu0 %803
        %805 = vadd.xlane.f32.xlu0 %v792
        %v806 = vpop.xlane.xlu0 %805
        %807 = vadd.xlane.f32.xlu0 %v793
        %v808 = vpop.xlane.xlu0 %807
        %809 = vadd.xlane.f32.xlu0 %v794
        %v810 = vpop.xlane.xlu0 %809
        %v811 = vmul.f32 %v796, %v770
        %v812 = vmul.f32 %v798, %v770
        %v813 = vmul.f32 %v800, %v770
        %v814 = vmul.f32 %v802, %v770
        %v815 = vmul.f32 %v804, %v770
        %v816 = vmul.f32 %v806, %v770
        %v817 = vmul.f32 %v808, %v770
        %v818 = vmul.f32 %v810, %v770
        %v819 = vadd.f32 %v811, 1e-12
        %v820 = vadd.f32 %v812, 1e-12
        %v821 = vadd.f32 %v813, 1e-12
        %v822 = vadd.f32 %v814, 1e-12
        %v823 = vadd.f32 %v815, 1e-12
        %v824 = vadd.f32 %v816, 1e-12
        %v825 = vadd.f32 %v817, 1e-12
        %v826 = vadd.f32 %v818, 1e-12
        %v827 = vrsqrt.pop %v819
        %v828 = vrsqrt.pop %v820
        %v829 = vrsqrt.pop %v821
        %v830 = vrsqrt.pop %v822
        %v831 = vrsqrt.pop %v823
        %v832 = vrsqrt.pop %v824
        %v833 = vrsqrt.pop %v825
        %v834 = vrsqrt.pop %v826
        %v835 = vmul.f32 %v779, %v827
        %v836 = vmul.f32 %v780, %v828
        %v837 = vmul.f32 %v781, %v829
        %v838 = vmul.f32 %v782, %v830
        %v839 = vmul.f32 %v783, %v831
        %v840 = vmul.f32 %v784, %v832
        %v841 = vmul.f32 %v785, %v833
        %v842 = vmul.f32 %v786, %v834
        %v843 = vlaneseq
        %v844 = vshrl.u32 %v843, 7
        %v845 = vsub.s32 1, %v844
        %v846 = vrot.slane %v299, %v845
        %v847 = vmul.f32 %v835, %v846
        %v848 = vmul.f32 %v836, %v846
        %v849 = vmul.f32 %v837, %v846
        %v850 = vmul.f32 %v838, %v846
        %v851 = vmul.f32 %v839, %v846
        %v852 = vmul.f32 %v840, %v846
        %v853 = vmul.f32 %v841, %v846
        %v854 = vmul.f32 %v842, %v846
        %v855 = vlaneseq
        %v856 = vshrl.u32 %v855, 7
        %v857 = vsub.s32 2, %v856
        %v858 = vrot.slane %v299, %v857
        %v859 = vadd.f32 %v847, %v858
        %v860 = vadd.f32 %v848, %v858
        %v861 = vadd.f32 %v849, %v858
        %v862 = vadd.f32 %v850, %v858
        %v863 = vadd.f32 %v851, %v858
        %v864 = vadd.f32 %v852, %v858
        %v865 = vadd.f32 %v853, %v858
        %v866 = vadd.f32 %v854, %v858
        %867 = vst [vmem:[%s281] sm:$0xff] %v859
        %868 = vst [vmem:[%s281 + $0x8] sm:$0xff] %v860
        %869 = vst [vmem:[%s281 + $0x10] sm:$0xff] %v861
        %870 = vst [vmem:[%s281 + $0x18] sm:$0xff] %v862
        %871 = vst [vmem:[%s281 + $0x20] sm:$0xff] %v863
        %872 = vst [vmem:[%s281 + $0x28] sm:$0xff] %v864
        %873 = vst [vmem:[%s281 + $0x30] sm:$0xff] %v865
        %874 = vst [vmem:[%s281 + $0x38] sm:$0xff] %v866
        %s875 = sand.u32 %s124, 1
        %s876 = scalar_lea.sflag [#allocation4], %s875
        %s877 = sand.u32 %s124, 1
        %s878 = smul.addr %s877, 64
        %s879 = scalar_lea.vmem [#allocation8], %s878
        // Predicated region
        $region49: #{tpu_custom_call.1} parent=35 // pred_check
          %p880 = pneg %p134
        $region50: #{tpu_custom_call.1} parent=35 // pred_check_branch
          %882 = sbr.rel (%p880) target = $region52
        $region51: #{tpu_custom_call.1} parent=35 // pred_region
          %s883 = smul.u32 8, %s22
          %s884 = ssub.s32 18, %s883
          %p885 = scmp.lt.s32.totalorder %s884, 8
          %s886 = scalar_select %p885, %s884, 8
          %s887 = smul.u32 128, %s886
          %s889 = ssub.s32 1024, %s887
          %890 = vsyncadd %s876, %s889
          %p891 = scmp.ne.s32.totalorder 0, %s887
          %s892 = smul.addr %s883, 128
          %s893 = scalar_lea.hbm %s4, %s892
          %s894 = smul.u32 8, %s886
          %s895 = sshll.u32 %s879, 4
          %s896 = int_to_ptr.vmem [resolvable:$true] %s895
          %s897 = sshll.u32 %s894, 4
          %901 = dma.vmem_to_hbm [thread:$0]  (%p891), %s896, %s897, %s893, %s876, 128, 128, 8
        $region52: #{tpu_custom_call.1} parent=35 // pred_fallthru
          _
      $region36: #{tpu_custom_call.1} parent=5 // pred_fallthru
        _
      %p902 = scmp.le.s32.totalorder 2, %s17
      // Predicated region
      $region53: #{tpu_custom_call.1} parent=5 // pred_check
        %p903 = pneg %p902
      $region54: #{tpu_custom_call.1} parent=5 // pred_check_branch
        %905 = sbr.rel (%p903) target = $region56
      $region55: #{tpu_custom_call.1} parent=5 // pred_region
        %s906 = ssub.s32 %s17, 2
        // Predicated region
        $region57: #{tpu_custom_call.1} parent=55 // pred_check
          %p907 = pneg %p140
        $region58: #{tpu_custom_call.1} parent=55 // pred_check_branch
          %909 = sbr.rel (%p907) target = $region60
        $region59: #{tpu_custom_call.1} parent=55 // pred_region
          %s910 = sand.u32 %s125, 1
          %s911 = scalar_lea.sflag [#allocation4], %s910
          %s912 = sand.u32 %s125, 1
          %s913 = smul.addr %s912, 64
          %s914 = scalar_lea.vmem [#allocation8], %s913
          %915 = dma.done %s911, 1024
        $region60: #{tpu_custom_call.1} parent=55 // pred_fallthru
          _
      $region56: #{tpu_custom_call.1} parent=5 // pred_fallthru
        _
    $region6: #{tpu_custom_call.1} parent=1 // loop_footer
      %s21 = sadd.s32 1, %s17
    $region7: #{tpu_custom_call.1} parent=1 // loop_footer_branch
      %16 = sbr.rel target = $region3
    $region8: #{tpu_custom_call.1} parent=1 // loop_exit
      _
    %916 = vsyncpa [#allocation3], 1
    %s917 = scalar_lea.sflag [#allocation3], 1
    %918 = vsyncpa %s917, 1
    %919 = vsyncpa [#allocation6], 1
    %920 = vsyncpa [#allocation4], 1
    %s921 = scalar_lea.sflag [#allocation4], 1
    %922 = vsyncpa %s921, 1

</llo_original>
